<compile_context>
chip_gen: v5e
topology: v5e:2x2
jax: 0.10.0
libtpu: 0.0.40
codegen_flags: <defaults>
</compile_context>

<pallas_src>
import functools
import math

import numpy as np
import jax
import jax.numpy as jnp
from jax.experimental import pallas as pl
from jax.experimental.pallas import tpu as pltpu


def _round_up(a, m):
    return ((a + m - 1) // m) * m


# ----------------------------------------------------------------------------
# Host-side parameter construction (deterministic numpy) -- "glue".
# ----------------------------------------------------------------------------
def hann_window_periodic(n_fft):
    n = np.arange(n_fft, dtype=np.float64)
    return 0.5 - 0.5 * np.cos(2.0 * np.pi * n / n_fft)


def melscale_fbanks(n_freqs, f_min, f_max, n_mels, sample_rate):
    # htk mel scale, norm=None (torchaudio MelSpectrogram defaults).
    def hz_to_mel(f):
        return 2595.0 * np.log10(1.0 + f / 700.0)

    def mel_to_hz(m):
        return 700.0 * (10.0 ** (m / 2595.0) - 1.0)

    all_freqs = np.linspace(0.0, sample_rate / 2.0, n_freqs)
    m_pts = np.linspace(hz_to_mel(f_min), hz_to_mel(f_max), n_mels + 2)
    f_pts = mel_to_hz(m_pts)
    f_diff = f_pts[1:] - f_pts[:-1]
    slopes = f_pts[None, :] - all_freqs[:, None]
    down = (-slopes[:, :-2]) / f_diff[:-1]
    up = slopes[:, 2:] / f_diff[1:]
    return np.maximum(0.0, np.minimum(down, up))          # (n_freqs, n_mels)


def create_dct(n_mfcc, n_mels):
    # torchaudio.functional.create_dct(norm='ortho') -> (n_mels, n_mfcc)
    n = np.arange(n_mels, dtype=np.float64)
    k = np.arange(n_mfcc, dtype=np.float64)[:, None]
    dct = np.cos(np.pi / n_mels * (n + 0.5) * k)           # (n_mfcc, n_mels)
    dct[0] *= 1.0 / math.sqrt(2.0)
    dct *= math.sqrt(2.0 / n_mels)
    return dct.T                                           # (n_mels, n_mfcc)


def build_params(fc_w, fc_b, *, sr, n_fft, n_mels, n_mfcc, f_min, f_max,
                 normalized=True):
    """Build the packed, padded, window-folded matrices used by the kernels.

    Returns:
      dft_comb : (n_fft, 2*n_freq_pad) bf16  -- [win*scale*cos | win*scale*sin], freq padded
      fb_pad   : (n_freq_pad, n_mels_pad) bf16 -- mel filterbank, zero padded
      w_comb   : (n_mels_pad, z_dim) f32     -- DCT @ fc.weight.T, zero-padded mel rows
      bias     : (1, z_dim) f32
    """
    n_freq = n_fft // 2 + 1
    n_freq_pad = _round_up(n_freq, 128)
    n_mels_pad = _round_up(n_mels, 128)

    window = hann_window_periodic(n_fft)
    scale = 1.0 / math.sqrt(float(np.sum(window ** 2))) if normalized else 1.0
    wcol = (window * scale)[:, None]

    n = np.arange(n_fft, dtype=np.float64)[:, None]
    k = np.arange(n_freq, dtype=np.float64)[None, :]
    ang = 2.0 * np.pi * n * k / n_fft
    cos_m = np.zeros((n_fft, n_freq_pad), np.float64)
    sin_m = np.zeros((n_fft, n_freq_pad), np.float64)
    cos_m[:, :n_freq] = np.cos(ang) * wcol
    sin_m[:, :n_freq] = np.sin(ang) * wcol                 # sign irrelevant: squared
    dft_comb = np.concatenate([cos_m, sin_m], axis=1)      # (n_fft, 2*n_freq_pad)

    fb_pad = np.zeros((n_freq_pad, n_mels_pad), np.float64)
    fb_pad[:n_freq, :n_mels] = melscale_fbanks(n_freq, f_min, f_max, n_mels, sr)

    dct_m = create_dct(n_mfcc, n_mels)                     # (n_mels, n_mfcc)
    z_dim = np.asarray(fc_w).shape[1]
    w_comb = np.zeros((n_mels_pad, z_dim), np.float64)
    w_comb[:n_mels, :] = dct_m @ np.asarray(fc_w, np.float64)
    bias = np.asarray(fc_b, np.float64).reshape(1, z_dim)

    return (jnp.asarray(dft_comb, jnp.bfloat16),
            jnp.asarray(fb_pad, jnp.bfloat16),
            jnp.asarray(w_comb, jnp.float32),
            jnp.asarray(bias, jnp.float32))


# ----------------------------------------------------------------------------
# Kernel 1: waveform chunks -> mel power spectrogram in dB (per (batch, frame-tile)).
# ----------------------------------------------------------------------------
def mel_db_kernel(chunk_ref, tail_ref, dft_ref, fb_ref, out_ref,
                  *, hop, n_shifts, tile_frames, n_freq_pad):
    # Samples needed by this frame tile: (tile_frames + extra) hop-sized chunk rows.
    win = jnp.concatenate([chunk_ref[0], tail_ref[0]], axis=0)       # (TF+extra, hop) f32

    # frames @ [win*cos | win*sin]  ==  sum_j shifted_chunks @ dft[j*hop:(j+1)*hop, :]
    acc = None
    for j in range(n_shifts):
        lhs = win[j:j + tile_frames].astype(jnp.bfloat16)            # (TF, hop)
        rhs = dft_ref[j * hop:(j + 1) * hop, :]                      # (hop, 2*Npad) bf16
        part = jnp.dot(lhs, rhs, preferred_element_type=jnp.float32)
        acc = part if acc is None else acc + part                    # (TF, 2*Npad) f32

    re = acc[:, :n_freq_pad]
    im = acc[:, n_freq_pad:]
    power = re * re + im * im                                        # (TF, Npad) f32
    mel = jnp.dot(power.astype(jnp.bfloat16), fb_ref[...],
                  preferred_element_type=jnp.float32)                # (TF, n_mels_pad)
    out_ref[0] = 10.0 * jnp.log10(jnp.maximum(mel, 1e-10))           # dB (amin=1e-10)


# ----------------------------------------------------------------------------
# Kernel 2 (head): top_db clamp, masked time-mean, fused DCT+Linear.
# ----------------------------------------------------------------------------
def head_kernel(gmax_ref, mel_ref, w_ref, b_ref, z_ref, acc_ref,
                *, top_db, n_frames, tile_frames):
    t = pl.program_id(1)

    @pl.when(t == 0)
    def _():
        acc_ref[...] = jnp.zeros_like(acc_ref)

    x = mel_ref[0]                                                   # (TF, n_mels_pad)
    x = jnp.maximum(x, gmax_ref[0, 0] - top_db)                      # AmplitudeToDB top_db
    fidx = t * tile_frames + jax.lax.broadcasted_iota(
        jnp.int32, (tile_frames, 1), 0)
    x = jnp.where(fidx < n_frames, x, 0.0)                           # drop padded frames
    acc_ref[...] += jnp.sum(x, axis=0, keepdims=True)                # (1, n_mels_pad)

    @pl.when(t == pl.num_programs(1) - 1)
    def _():
        mean = acc_ref[...] * (1.0 / n_frames)                       # mean over time
        z_ref[0] = (jnp.dot(mean, w_ref[...],
                            preferred_element_type=jnp.float32)      # DCT + fc fused
                    + b_ref[...])


# ----------------------------------------------------------------------------
# Wrapper.
# ----------------------------------------------------------------------------
def wave2mfcc_encoder(x, dft_comb, fb_pad, w_comb, bias, *, n_fft, hop_length,
                      top_db=80.0, tile_frames=256):
    B, T = x.shape
    # TODO(synk): non-divisor hop_length would need a gather-based framing path.
    assert n_fft % hop_length == 0, "hop_length must divide n_fft"
    R = n_fft // hop_length
    n_freq_pad = dft_comb.shape[1] // 2
    n_mels_pad = fb_pad.shape[1]
    z_dim = w_comb.shape[1]

    # --- STFT framing metadata (center=True, reflect pad) -- torch.stft convention.
    pad = n_fft // 2
    n_frames = 1 + T // hop_length

    extra = max(8, _round_up(max(R - 1, 1), 8))           # overlap rows from next tile
    tf = _round_up(min(tile_frames, _round_up(n_frames, extra)), extra)
    f_pad = _round_up(n_frames, tf)
    n_tiles = f_pad // tf
    c_pad = f_pad + extra                                 # total chunk rows per batch

    # Non-overlapping hop-sized chunks of the reflect-padded waveform (no frame dup).
    xp = jnp.pad(x, ((0, 0), (pad, pad)), mode="reflect")
    c_avail = min(c_pad, xp.shape[1] // hop_length)
    chunks = xp[:, :c_avail * hop_length].reshape(B, c_avail, hop_length)
    if c_pad > c_avail:
        chunks = jnp.pad(chunks, ((0, 0), (0, c_pad - c_avail), (0, 0)))

    # --- Kernel 1: mel power spectrogram in dB, tiled over (batch, frame tiles).
    mel_db = pl.pallas_call(
        functools.partial(mel_db_kernel, hop=hop_length, n_shifts=R,
                          tile_frames=tf, n_freq_pad=n_freq_pad),
        out_shape=jax.ShapeDtypeStruct((B, f_pad, n_mels_pad), jnp.float32),
        grid_spec=pltpu.PrefetchScalarGridSpec(
            num_scalar_prefetch=0,
            grid=(B, n_tiles),
            in_specs=[
                # this tile's chunks
                pl.BlockSpec((1, tf, hop_length), lambda b, t: (b, t, 0)),
                # first `extra` chunk rows of the next tile (same array, shifted spec)
                pl.BlockSpec((1, extra, hop_length),
                             lambda b, t: (b, (t + 1) * (tf // extra), 0)),
                pl.BlockSpec(dft_comb.shape, lambda b, t: (0, 0)),
                pl.BlockSpec(fb_pad.shape, lambda b, t: (0, 0)),
            ],
            out_specs=pl.BlockSpec((1, tf, n_mels_pad), lambda b, t: (b, t, 0)),
        ),
        compiler_params=pltpu.CompilerParams(
            dimension_semantics=("parallel", "parallel"),
            vmem_limit_bytes=32 * 1024 * 1024),
    )(chunks, chunks, dft_comb, fb_pad)

    # Global max of the *valid* frames for torchaudio's batch-wide top_db clamp (glue).
    gmax = jnp.max(mel_db[:, :n_frames, :]).reshape(1, 1)

    # --- Kernel 2: streaming clamp + masked mean + fused DCT/Linear.
    z = pl.pallas_call(
        functools.partial(head_kernel, top_db=top_db, n_frames=n_frames,
                          tile_frames=tf),
        out_shape=jax.ShapeDtypeStruct((B, 1, z_dim), jnp.float32),
        grid_spec=pltpu.PrefetchScalarGridSpec(
            num_scalar_prefetch=0,
            grid=(B, n_tiles),
            in_specs=[
                pl.BlockSpec((1, 1), lambda b, t: (0, 0)),
                pl.BlockSpec((1, tf, n_mels_pad), lambda b, t: (b, t, 0)),
                pl.BlockSpec(w_comb.shape, lambda b, t: (0, 0)),
                pl.BlockSpec(bias.shape, lambda b, t: (0, 0)),
            ],
            out_specs=pl.BlockSpec((1, 1, z_dim), lambda b, t: (b, 0, 0)),
            scratch_shapes=[pltpu.VMEM((1, n_mels_pad), jnp.float32)],
        ),
        compiler_params=pltpu.CompilerParams(
            dimension_semantics=("parallel", "arbitrary")),
    )(gmax, mel_db, w_comb, bias)

    return z.reshape(B, z_dim)


# ----------------------------------------------------------------------------
# Demo.
# ----------------------------------------------------------------------------
if __name__ == "__main__":
    # Small, shape-consistent instantiation of the module hyperparameters.
    sr = 16000
    n_fft = 512
    hop_length = 128
    n_mels = 64
    n_mfcc = 40
    z_dim = 32
    f_min, f_max = 20.0, 8000.0
    normalized = True          # matches the module's melkwargs normalized=True

    B, T = 2, 8192

    key = jax.random.PRNGKey(0)
    kx, kw, kb = jax.random.split(key, 3)
    x = jax.random.normal(kx, (B, T), dtype=jnp.float32)

    bound = 1.0 / math.sqrt(n_mfcc)
    fc_w = jax.random.uniform(kw, (n_mfcc, z_dim), jnp.float32, -bound, bound)  # weight.T
    fc_b = jax.random.uniform(kb, (z_dim,), jnp.float32, -bound, bound)

    dft_comb, fb_pad, w_comb, bias = build_params(
        np.asarray(fc_w), np.asarray(fc_b), sr=sr, n_fft=n_fft, n_mels=n_mels,
        n_mfcc=n_mfcc, f_min=f_min, f_max=f_max, normalized=normalized)

    z = wave2mfcc_encoder(x, dft_comb, fb_pad, w_comb, bias,
                          n_fft=n_fft, hop_length=hop_length, top_db=80.0)
    z = jax.block_until_ready(z)
    assert z.shape == (B, z_dim) and z.dtype == jnp.float32
    assert bool(jnp.all(jnp.isfinite(z)))
    print("KERNEL_OK")
</pallas_src>

<mosaic_0001>
module attributes {stable_mosaic.version = 11 : i64} {
  func.func @mel_db_kernel(%arg0: i32, %arg1: i32, %arg2: memref<1x72x128xf32, #tpu.memory_space<vmem>>, %arg3: memref<1x8x128xf32, #tpu.memory_space<vmem>>, %arg4: memref<512x768xbf16, #tpu.memory_space<vmem>>, %arg5: memref<384x128xbf16, #tpu.memory_space<vmem>>, %arg6: memref<1x72x128xf32, #tpu.memory_space<vmem>>) attributes {dimension_semantics = [#tpu.dimension_semantics<parallel>, #tpu.dimension_semantics<parallel>], iteration_bounds = array<i64: 2, 1>, scalar_prefetch = 0 : i64, scratch_operands = 0 : i64, tpu.core_type = #tpu.core_type<tc>, window_params = [{transform_indices = @transform_0, window_bounds = array<i64: 1, 72, 128>}, {transform_indices = @transform_1, window_bounds = array<i64: 1, 8, 128>}, {pipeline_mode = #tpu.pipeline_mode<synchronous>, transform_indices = @transform_2, window_bounds = array<i64: 512, 768>}, {pipeline_mode = #tpu.pipeline_mode<synchronous>, transform_indices = @transform_3, window_bounds = array<i64: 384, 128>}, {transform_indices = @transform_4, window_bounds = array<i64: 1, 72, 128>}]} {
    %c0 = arith.constant 0 : index
    %c0_0 = arith.constant 0 : index
    %c0_1 = arith.constant 0 : index
    %0 = vector.load %arg2[%c0, %c0_0, %c0_1] : memref<1x72x128xf32, #tpu.memory_space<vmem>>, vector<1x72x128xf32>
    %1 = vector.shape_cast %0 : vector<1x72x128xf32> to vector<72x128xf32>
    %c0_2 = arith.constant 0 : index
    %c0_3 = arith.constant 0 : index
    %c0_4 = arith.constant 0 : index
    %2 = vector.load %arg3[%c0_2, %c0_3, %c0_4] : memref<1x8x128xf32, #tpu.memory_space<vmem>>, vector<1x8x128xf32>
    %3 = vector.shape_cast %2 : vector<1x8x128xf32> to vector<8x128xf32>
    %4 = tpu.concatenate %1, %3 in 0 : vector<72x128xf32>, vector<8x128xf32> -> vector<80x128xf32>
    %5 = vector.extract_strided_slice %4 {offsets = [0, 0], sizes = [72, 128], strides = [1, 1]} : vector<80x128xf32> to vector<72x128xf32>
    %6 = arith.truncf %5 : vector<72x128xf32> to vector<72x128xbf16>
    %c0_5 = arith.constant 0 : index
    %c0_6 = arith.constant 0 : index
    %7 = vector.load %arg4[%c0_5, %c0_6] : memref<512x768xbf16, #tpu.memory_space<vmem>>, vector<128x768xbf16>
    %cst = arith.constant dense<0.000000e+00> : vector<72x768xf32>
    %8 = tpu.matmul %6, %7, %cst {dimension_numbers = #tpu.dot_dimension_numbers<[1], [0], [0], [1], [0, 0, 1, 1], [], []>} : vector<72x128xbf16>, vector<128x768xbf16>, vector<72x768xf32> -> vector<72x768xf32>
    %9 = vector.extract_strided_slice %4 {offsets = [1, 0], sizes = [72, 128], strides = [1, 1]} : vector<80x128xf32> to vector<72x128xf32>
    %10 = arith.truncf %9 : vector<72x128xf32> to vector<72x128xbf16>
    %c128 = arith.constant 128 : index
    %c0_7 = arith.constant 0 : index
    %11 = vector.load %arg4[%c128, %c0_7] : memref<512x768xbf16, #tpu.memory_space<vmem>>, vector<128x768xbf16>
    %cst_8 = arith.constant dense<0.000000e+00> : vector<72x768xf32>
    %12 = tpu.matmul %10, %11, %cst_8 {dimension_numbers = #tpu.dot_dimension_numbers<[1], [0], [0], [1], [0, 0, 1, 1], [], []>} : vector<72x128xbf16>, vector<128x768xbf16>, vector<72x768xf32> -> vector<72x768xf32>
    %13 = arith.addf %8, %12 : vector<72x768xf32>
    %14 = vector.extract_strided_slice %4 {offsets = [2, 0], sizes = [72, 128], strides = [1, 1]} : vector<80x128xf32> to vector<72x128xf32>
    %15 = arith.truncf %14 : vector<72x128xf32> to vector<72x128xbf16>
    %c256 = arith.constant 256 : index
    %c0_9 = arith.constant 0 : index
    %16 = vector.load %arg4[%c256, %c0_9] : memref<512x768xbf16, #tpu.memory_space<vmem>>, vector<128x768xbf16>
    %cst_10 = arith.constant dense<0.000000e+00> : vector<72x768xf32>
    %17 = tpu.matmul %15, %16, %cst_10 {dimension_numbers = #tpu.dot_dimension_numbers<[1], [0], [0], [1], [0, 0, 1, 1], [], []>} : vector<72x128xbf16>, vector<128x768xbf16>, vector<72x768xf32> -> vector<72x768xf32>
    %18 = arith.addf %13, %17 : vector<72x768xf32>
    %19 = vector.extract_strided_slice %4 {offsets = [3, 0], sizes = [72, 128], strides = [1, 1]} : vector<80x128xf32> to vector<72x128xf32>
    %20 = arith.truncf %19 : vector<72x128xf32> to vector<72x128xbf16>
    %c384 = arith.constant 384 : index
    %c0_11 = arith.constant 0 : index
    %21 = vector.load %arg4[%c384, %c0_11] : memref<512x768xbf16, #tpu.memory_space<vmem>>, vector<128x768xbf16>
    %cst_12 = arith.constant dense<0.000000e+00> : vector<72x768xf32>
    %22 = tpu.matmul %20, %21, %cst_12 {dimension_numbers = #tpu.dot_dimension_numbers<[1], [0], [0], [1], [0, 0, 1, 1], [], []>} : vector<72x128xbf16>, vector<128x768xbf16>, vector<72x768xf32> -> vector<72x768xf32>
    %23 = arith.addf %18, %22 : vector<72x768xf32>
    %24 = vector.extract_strided_slice %23 {offsets = [0, 0], sizes = [72, 384], strides = [1, 1]} : vector<72x768xf32> to vector<72x384xf32>
    %25 = vector.extract_strided_slice %23 {offsets = [0, 384], sizes = [72, 384], strides = [1, 1]} : vector<72x768xf32> to vector<72x384xf32>
    %26 = arith.mulf %24, %24 : vector<72x384xf32>
    %27 = arith.mulf %25, %25 : vector<72x384xf32>
    %28 = arith.addf %26, %27 : vector<72x384xf32>
    %29 = arith.truncf %28 : vector<72x384xf32> to vector<72x384xbf16>
    %c0_13 = arith.constant 0 : index
    %c0_14 = arith.constant 0 : index
    %30 = vector.load %arg5[%c0_13, %c0_14] : memref<384x128xbf16, #tpu.memory_space<vmem>>, vector<384x128xbf16>
    %cst_15 = arith.constant dense<0.000000e+00> : vector<72x128xf32>
    %31 = tpu.matmul %29, %30, %cst_15 {dimension_numbers = #tpu.dot_dimension_numbers<[1], [0], [0], [1], [0, 0, 1, 1], [], []>} : vector<72x384xbf16>, vector<384x128xbf16>, vector<72x128xf32> -> vector<72x128xf32>
    %cst_16 = arith.constant 1.000000e-10 : f32
    %32 = vector.broadcast %cst_16 : f32 to vector<72x128xf32>
    %33 = arith.maximumf %31, %32 : vector<72x128xf32>
    %34 = math.log %33 : vector<72x128xf32>
    %cst_17 = arith.constant 0.434294492 : f32
    %35 = vector.broadcast %cst_17 : f32 to vector<72x128xf32>
    %36 = arith.mulf %34, %35 : vector<72x128xf32>
    %cst_18 = arith.constant 1.000000e+01 : f32
    %37 = vector.broadcast %cst_18 : f32 to vector<72x128xf32>
    %38 = arith.mulf %37, %36 : vector<72x128xf32>
    %c0_19 = arith.constant 0 : index
    %c0_20 = arith.constant 0 : index
    %c0_21 = arith.constant 0 : index
    %39 = vector.load %arg6[%c0_19, %c0_20, %c0_21] : memref<1x72x128xf32, #tpu.memory_space<vmem>>, vector<1x72x128xf32>
    %40 = vector.shape_cast %39 : vector<1x72x128xf32> to vector<72x128xf32>
    %41 = vector.shape_cast %38 : vector<72x128xf32> to vector<1x72x128xf32>
    tpu.vector_store %arg6[%c0_19, %c0_20, %c0_21], %41 {strides = array<i32>} : memref<1x72x128xf32, #tpu.memory_space<vmem>>, vector<1x72x128xf32>,
    return
  }
  func.func @transform_0(%arg0: i32, %arg1: i32) -> (i32, i32, i32) {
    %c0_i32 = arith.constant 0 : i32
    %c0_i32_0 = arith.constant 0 : i32
    return %arg0, %arg1, %c0_i32 : i32, i32, i32
  }
  func.func @transform_1(%arg0: i32, %arg1: i32) -> (i32, i32, i32) {
    %c1_i32 = arith.constant 1 : i32
    %0 = arith.addi %arg1, %c1_i32 : i32
    %c9_i32 = arith.constant 9 : i32
    %1 = arith.muli %0, %c9_i32 : i32
    %c0_i32 = arith.constant 0 : i32
    %c0_i32_0 = arith.constant 0 : i32
    return %arg0, %1, %c0_i32 : i32, i32, i32
  }
  func.func @transform_2(%arg0: i32, %arg1: i32) -> (i32, i32) {
    %c0_i32 = arith.constant 0 : i32
    %c0_i32_0 = arith.constant 0 : i32
    %c0_i32_1 = arith.constant 0 : i32
    return %c0_i32, %c0_i32_0 : i32, i32
  }
  func.func @transform_3(%arg0: i32, %arg1: i32) -> (i32, i32) {
    %c0_i32 = arith.constant 0 : i32
    %c0_i32_0 = arith.constant 0 : i32
    %c0_i32_1 = arith.constant 0 : i32
    return %c0_i32, %c0_i32_0 : i32, i32
  }
  func.func @transform_4(%arg0: i32, %arg1: i32) -> (i32, i32, i32) {
    %c0_i32 = arith.constant 0 : i32
    %c0_i32_0 = arith.constant 0 : i32
    return %arg0, %arg1, %c0_i32 : i32, i32, i32
  }
}

</mosaic_0001>

<llo_original>
// kernel: tpu_custom_call.1
$region0: #{tpu_custom_call.1}
  #allocation0 [shape = 'u32[]', space=smem, size = 0x4, offset = 0x4, fixed_abs, tag = 'smem constant byte address 0x4 - core index']
  #allocation1 [shape = 'u32[72,128]{1,0:T(1,128)}', space=vmem, size = 0x9000, scoped, tag = 'internal scratch']
  %s0 = inlined_call_operand.hbm [shape: f32[2,80,128], index: 0, kind: input, shape index: {}]
  %s1 = inlined_call_operand.hbm [shape: f32[2,80,128], index: 1, kind: input, shape index: {}]
  %s2 = inlined_call_operand.hbm [shape: bf16[512,768], index: 2, kind: input, shape index: {}]
  %s3 = inlined_call_operand.hbm [shape: bf16[384,128], index: 3, kind: input, shape index: {}]
  %s4 = inlined_call_operand.hbm [shape: f32[2,72,128], index: 4, kind: output, shape index: {}]
  %s5 = sld [smem:[#allocation0]]
  $region65: #{tpu_custom_call.1} parent=0
    _
  %s7 = ssub.s32 1, %s5
  %s8 = scalar_select 0, %s7, %s5
  $region1: #{tpu_custom_call.1} parent=0
    #allocation2 [shape = 'u8[73728]{0}', space=vmem, size = 0x12000, scoped, tag = 'input window, operand 0']
    #allocation3 [shape = 's32[2]{0}', space=sflag, size = 0x8, scoped, tag = 'scoped memory for tpu_custom_call.1']
    #allocation4 [shape = 's32[2]{0}', space=sflag, size = 0x8, scoped, tag = 'scoped memory for tpu_custom_call.1']
    #allocation5 [shape = 'u8[8192]{0}', space=vmem, size = 0x2000, scoped, tag = 'input window, operand 1']
    #allocation6 [shape = 's32[2]{0}', space=sflag, size = 0x8, scoped, tag = 'scoped memory for tpu_custom_call.1']
    #allocation7 [shape = 'u8[786432]{0}', space=vmem, size = 0xc0000, scoped, tag = 'input window, operand 2, single buffered']
    #allocation8 [shape = 'u8[98304]{0}', space=vmem, size = 0x18000, scoped, tag = 'input window, operand 3, single buffered']
    #allocation9 [shape = 's32[1]{0}', space=sflag, size = 0x4, scoped, tag = 'scoped memory for tpu_custom_call.1']
    #allocation10 [shape = 'u8[73728]{0}', space=vmem, size = 0x12000, scoped, tag = 'output window, operand 0']
    %9 = vsyncpa [#allocation3], 0
    %s10 = scalar_lea.sflag [#allocation3], 1
    %11 = vsyncpa %s10, 0
    %12 = vsyncpa [#allocation6], 0
    %s13 = scalar_lea.sflag [#allocation6], 1
    %14 = vsyncpa %s13, 0
    %15 = vsyncpa [#allocation9], 0
    %16 = vsyncpa [#allocation4], 0
    %s17 = scalar_lea.sflag [#allocation4], 1
    %18 = vsyncpa %s17, 0
    loop: start=0, step=1, limit=4
    $region2: #{tpu_custom_call.1} parent=1 // loop_pre_header
      _
    $region3: #{tpu_custom_call.1} parent=1 // loop_header
      %s20 = sphi 0, %s24
      %p21 = scmp.ge.s32.totalorder %s20, 4
      %s27 = sphi 0, %s39
      %s28 = sphi 0, %s35
      %s29 = sphi 0, %s27
      %s30 = sphi 0, %s28
      %s31 = sphi 0, %s29
      %s32 = sphi 0, %s30
      %s44 = sphi 0, %s46
      %s47 = sphi 0, %s44
      %s48 = sphi 0, %s47
      %s64 = sphi 0, %s48
      %s76 = sphi 0, %s78
      %s79 = sphi 0, %s76
      %s80 = sphi 0, %s79
      %s96 = sphi 0, %s80
      %s100 = sphi 0, %s100
      %s102 = sphi 0, %s100
      %s103 = sphi 0, %s102
      %s117 = sphi 0, %s103
      %s121 = sphi 0, %s121
      %s123 = sphi 0, %s121
      %s124 = sphi 0, %s123
      %s138 = sphi 0, %s124
      %s146 = sphi 0, %s148
      %s149 = sphi 0, %s146
      %s150 = sphi 0, %s149
      %s166 = sphi 0, %s150
    $region4: #{tpu_custom_call.1} parent=1 // loop_header_branch
      %23 = sbr.rel (%p21) target = $region8
    $region5: #{tpu_custom_call.1} parent=1 // loop_body
      %s25 = ssub.s32 %s20, 1
      %s26 = ssub.s32 %s20, 2
      %s33 = sadd.s32 1, %s28
      %p34 = scmp.ge.s32.totalorder %s33, 1
      %s35 = scalar_select %p34, 0, %s33
      %s36 = sadd.s32 1, %s27
      %s37 = scalar_select %p34, %s36, %s27
      %p38 = scmp.ge.s32.totalorder %s37, 2
      %s39 = scalar_select %p38, 0, %s37
      %s40 = ssub.s32 %s27, %s39
      %s41 = ssub.s32 %s28, %s35
      %s42 = sor.u32 %s40, %s41
      %p43 = scmp.eq.s32.totalorder %s42, 0
      %s45 = sadd.s32 %s44, 1
      %s46 = scalar_select %p43, %s44, %s45
      %p49 = pneg %p43
      %p50 = scmp.eq.s32.totalorder %s20, 1
      %p51 = por %p49, %p50
      %p52 = scmp.ne.s32.totalorder %s44, %s47
      %p53 = scmp.eq.s32.totalorder %s20, 0
      %p54 = por %p52, %p53
      %p55 = scmp.ne.s32.totalorder %s44, %s47
      %p56 = scmp.eq.s32.totalorder %s25, 1
      %p57 = por %p55, %p56
      %p58 = scmp.ne.s32.totalorder %s47, %s48
      %p59 = scmp.eq.s32.totalorder %s25, 0
      %p60 = por %p58, %p59
      %p61 = scmp.ne.s32.totalorder %s47, %s48
      %p62 = scmp.eq.s32.totalorder %s26, 1
      %p63 = por %p61, %p62
      %p65 = scmp.ne.s32.totalorder %s48, %s64
      %p66 = scmp.eq.s32.totalorder %s26, 0
      %p67 = por %p65, %p66
      %s68 = sadd.s32 %s28, 1
      %s69 = smul.u32 %s68, 9
      %s70 = sadd.s32 %s35, 1
      %s71 = smul.u32 %s70, 9
      %s72 = ssub.s32 %s27, %s39
      %s73 = ssub.s32 %s69, %s71
      %s74 = sor.u32 %s72, %s73
      %p75 = scmp.eq.s32.totalorder %s74, 0
      %s77 = sadd.s32 %s76, 1
      %s78 = scalar_select %p75, %s76, %s77
      %p81 = pneg %p75
      %p82 = scmp.eq.s32.totalorder %s20, 1
      %p83 = por %p81, %p82
      %p84 = scmp.ne.s32.totalorder %s76, %s79
      %p85 = scmp.eq.s32.totalorder %s20, 0
      %p86 = por %p84, %p85
      %p87 = scmp.ne.s32.totalorder %s76, %s79
      %p88 = scmp.eq.s32.totalorder %s25, 1
      %p89 = por %p87, %p88
      %p90 = scmp.ne.s32.totalorder %s79, %s80
      %p91 = scmp.eq.s32.totalorder %s25, 0
      %p92 = por %p90, %p91
      %p93 = scmp.ne.s32.totalorder %s79, %s80
      %p94 = scmp.eq.s32.totalorder %s26, 1
      %p95 = por %p93, %p94
      %p97 = scmp.ne.s32.totalorder %s80, %s96
      %p98 = scmp.eq.s32.totalorder %s26, 0
      %p99 = por %p97, %p98
      %s101 = sadd.s32 %s100, 1
      %p104 = scmp.eq.s32.totalorder %s20, 1
      %p105 = scmp.ne.s32.totalorder %s100, %s102
      %p106 = scmp.eq.s32.totalorder %s20, 0
      %p107 = por %p105, %p106
      %p108 = scmp.ne.s32.totalorder %s100, %s102
      %p109 = scmp.eq.s32.totalorder %s25, 1
      %p110 = por %p108, %p109
      %p111 = scmp.ne.s32.totalorder %s102, %s103
      %p112 = scmp.eq.s32.totalorder %s25, 0
      %p113 = por %p111, %p112
      %p114 = scmp.ne.s32.totalorder %s102, %s103
      %p115 = scmp.eq.s32.totalorder %s26, 1
      %p116 = por %p114, %p115
      %p118 = scmp.ne.s32.totalorder %s103, %s117
      %p119 = scmp.eq.s32.totalorder %s26, 0
      %p120 = por %p118, %p119
      %s122 = sadd.s32 %s121, 1
      %p125 = scmp.eq.s32.totalorder %s20, 1
      %p126 = scmp.ne.s32.totalorder %s121, %s123
      %p127 = scmp.eq.s32.totalorder %s20, 0
      %p128 = por %p126, %p127
      %p129 = scmp.ne.s32.totalorder %s121, %s123
      %p130 = scmp.eq.s32.totalorder %s25, 1
      %p131 = por %p129, %p130
      %p132 = scmp.ne.s32.totalorder %s123, %s124
      %p133 = scmp.eq.s32.totalorder %s25, 0
      %p134 = por %p132, %p133
      %p135 = scmp.ne.s32.totalorder %s123, %s124
      %p136 = scmp.eq.s32.totalorder %s26, 1
      %p137 = por %p135, %p136
      %p139 = scmp.ne.s32.totalorder %s124, %s138
      %p140 = scmp.eq.s32.totalorder %s26, 0
      %p141 = por %p139, %p140
      %s142 = ssub.s32 %s27, %s39
      %s143 = ssub.s32 %s28, %s35
      %s144 = sor.u32 %s142, %s143
      %p145 = scmp.eq.s32.totalorder %s144, 0
      %s147 = sadd.s32 %s146, 1
      %s148 = scalar_select %p145, %s146, %s147
      %p151 = pneg %p145
      %p152 = scmp.eq.s32.totalorder %s20, 1
      %p153 = por %p151, %p152
      %p154 = scmp.ne.s32.totalorder %s146, %s149
      %p155 = scmp.eq.s32.totalorder %s20, 0
      %p156 = por %p154, %p155
      %p157 = scmp.ne.s32.totalorder %s146, %s149
      %p158 = scmp.eq.s32.totalorder %s25, 1
      %p159 = por %p157, %p158
      %p160 = scmp.ne.s32.totalorder %s149, %s150
      %p161 = scmp.eq.s32.totalorder %s25, 0
      %p162 = por %p160, %p161
      %p163 = scmp.ne.s32.totalorder %s149, %s150
      %p164 = scmp.eq.s32.totalorder %s26, 1
      %p165 = por %p163, %p164
      %p167 = scmp.ne.s32.totalorder %s150, %s166
      %p168 = scmp.eq.s32.totalorder %s26, 0
      %p169 = por %p167, %p168
      %p170 = scmp.le.s32.totalorder 1, %s20
      %p171 = scmp.lt.s32.totalorder %s20, 3
      %p172 = pnand %p170, %p171
      %p173 = pneg %p172
      // Predicated region
      $region9: #{tpu_custom_call.1} parent=5 // pred_check
        _
      $region10: #{tpu_custom_call.1} parent=5 // pred_check_branch
        %175 = sbr.rel (%p172) target = $region12
      $region11: #{tpu_custom_call.1} parent=5 // pred_region
        %s176 = ssub.s32 %s20, 1
        // Predicated region
        $region13: #{tpu_custom_call.1} parent=11 // pred_check
          %p177 = pneg %p113
        $region14: #{tpu_custom_call.1} parent=11 // pred_check_branch
          %179 = sbr.rel (%p177) target = $region16
        $region15: #{tpu_custom_call.1} parent=11 // pred_region
          %181 = vsyncadd [#allocation6], 0
          %s182 = sshll.u32 %s2, 4
          %s183 = int_to_ptr.hbm [resolvable:$true] %s182
          %s184 = sshll.u32 [#allocation7], 4
          %s185 = int_to_ptr.vmem [resolvable:$true] %s184
          %190 = dma.hbm_to_vmem [thread:$0]  %s183, 24576, %s185, [#allocation6], 384, 384, 24
        $region16: #{tpu_custom_call.1} parent=11 // pred_fallthru
          _
        // Predicated region
        $region17: #{tpu_custom_call.1} parent=11 // pred_check
          %p191 = pneg %p134
        $region18: #{tpu_custom_call.1} parent=11 // pred_check_branch
          %193 = sbr.rel (%p191) target = $region20
        $region19: #{tpu_custom_call.1} parent=11 // pred_region
          %195 = vsyncadd [#allocation9], 0
          %s196 = sshll.u32 %s3, 4
          %s197 = int_to_ptr.hbm [resolvable:$true] %s196
          %s198 = sshll.u32 [#allocation8], 4
          %s199 = int_to_ptr.vmem [resolvable:$true] %s198
          %204 = dma.hbm_to_vmem [thread:$0]  %s197, 3072, %s199, [#allocation9], 64, 64, 4
        $region20: #{tpu_custom_call.1} parent=11 // pred_fallthru
          _
      $region12: #{tpu_custom_call.1} parent=5 // pred_fallthru
        _
      %p205 = scmp.lt.s32.totalorder %s20, 2
      // Predicated region
      $region21: #{tpu_custom_call.1} parent=5 // pred_check
        %p206 = pneg %p205
      $region22: #{tpu_custom_call.1} parent=5 // pred_check_branch
        %208 = sbr.rel (%p206) target = $region24
      $region23: #{tpu_custom_call.1} parent=5 // pred_region
        // Predicated region
        $region25: #{tpu_custom_call.1} parent=23 // pred_check
          %p209 = pneg %p54
        $region26: #{tpu_custom_call.1} parent=23 // pred_check_branch
          %211 = sbr.rel (%p209) target = $region28
        $region27: #{tpu_custom_call.1} parent=23 // pred_region
          %s212 = sand.u32 %s44, 1
          %s213 = scalar_lea.sflag [#allocation3], %s212
          %s214 = sand.u32 %s44, 1
          %s215 = smul.addr %s214, 72
          %s216 = scalar_lea.vmem [#allocation2], %s215
          %s217 = smul.u32 9, %s28
          %s218 = ssub.s32 10, %s217
          %p219 = scmp.lt.s32.totalorder %s218, 9
          %s220 = scalar_select %p219, %s218, 9
          %s221 = smul.u32 8, %s220
          %s222 = ssub.s32 72, %s221
          %s223 = sshll.u32 %s222, 4
          %224 = vsyncadd %s213, %s223
          %p225 = scmp.ne.s32.totalorder 0, %s221
          %s226 = smul.addr %s27, 10
          %s227 = sadd.s32 %s217, %s226
          %s228 = smul.addr %s227, 8
          %s229 = scalar_lea.hbm %s0, %s228
          %s230 = smul.u32 8, %s220
          %s231 = sshll.u32 %s229, 4
          %s232 = int_to_ptr.hbm [resolvable:$true] %s231
          %s233 = sshll.u32 %s216, 4
          %s234 = int_to_ptr.vmem [resolvable:$true] %s233
          %s235 = sshll.u32 %s230, 4
          %239 = dma.hbm_to_vmem [thread:$0]  (%p225), %s232, %s235, %s234, %s213, 128, 128, 8
        $region28: #{tpu_custom_call.1} parent=23 // pred_fallthru
          _
        // Predicated region
        $region29: #{tpu_custom_call.1} parent=23 // pred_check
          %p240 = pneg %p86
        $region30: #{tpu_custom_call.1} parent=23 // pred_check_branch
          %242 = sbr.rel (%p240) target = $region32
        $region31: #{tpu_custom_call.1} parent=23 // pred_region
          %s243 = sand.u32 %s20, 1
          %s244 = scalar_lea.sflag [#allocation6], %s243
          %s245 = sand.u32 %s76, 1
          %s246 = smul.addr %s245, 8
          %s247 = scalar_lea.vmem [#allocation5], %s246
          %s248 = sadd.s32 %s28, 1
          %s249 = smul.u32 %s248, 9
          %251 = vsyncadd %s244, 0
          %s252 = smul.addr %s27, 10
          %s253 = sadd.s32 %s249, %s252
          %s254 = smul.addr %s253, 8
          %s255 = scalar_lea.hbm %s1, %s254
          %s257 = sshll.u32 %s255, 4
          %s258 = int_to_ptr.hbm [resolvable:$true] %s257
          %s259 = sshll.u32 %s247, 4
          %s260 = int_to_ptr.vmem [resolvable:$true] %s259
          %262 = dma.hbm_to_vmem [thread:$0]  %s258, 128, %s260, %s244
        $region32: #{tpu_custom_call.1} parent=23 // pred_fallthru
          _
      $region24: #{tpu_custom_call.1} parent=5 // pred_fallthru
        _
      %p263 = scmp.le.s32.totalorder 1, %s20
      %p264 = scmp.lt.s32.totalorder %s20, 3
      %p265 = pnand %p263, %p264
      %p266 = pneg %p265
      // Predicated region
      $region33: #{tpu_custom_call.1} parent=5 // pred_check
        _
      $region34: #{tpu_custom_call.1} parent=5 // pred_check_branch
        %268 = sbr.rel (%p265) target = $region36
      $region35: #{tpu_custom_call.1} parent=5 // pred_region
        %s269 = ssub.s32 %s20, 1
        %s270 = sand.u32 %s47, 1
        %s271 = scalar_lea.sflag [#allocation3], %s270
        %s272 = sand.u32 %s47, 1
        %s273 = smul.addr %s272, 72
        %s274 = scalar_lea.vmem [#allocation2], %s273
        // Predicated region
        $region37: #{tpu_custom_call.1} parent=35 // pred_check
          %p275 = pneg %p60
        $region38: #{tpu_custom_call.1} parent=35 // pred_check_branch
          %277 = sbr.rel (%p275) target = $region40
        $region39: #{tpu_custom_call.1} parent=35 // pred_region
          %279 = dma.done %s271, 1152
        $region40: #{tpu_custom_call.1} parent=35 // pred_fallthru
          _
        %s280 = sand.u32 %s25, 1
        %s281 = scalar_lea.sflag [#allocation6], %s280
        %s282 = sand.u32 %s79, 1
        %s283 = smul.addr %s282, 8
        %s284 = scalar_lea.vmem [#allocation5], %s283
        // Predicated region
        $region41: #{tpu_custom_call.1} parent=35 // pred_check
          %p285 = pneg %p92
        $region42: #{tpu_custom_call.1} parent=35 // pred_check_branch
          %287 = sbr.rel (%p285) target = $region44
        $region43: #{tpu_custom_call.1} parent=35 // pred_region
          %289 = dma.done %s281, 128
        $region44: #{tpu_custom_call.1} parent=35 // pred_fallthru
          _
        // Predicated region
        $region45: #{tpu_custom_call.1} parent=35 // pred_check
          %p290 = pneg %p113
        $region46: #{tpu_custom_call.1} parent=35 // pred_check_branch
          %292 = sbr.rel (%p290) target = $region48
        $region47: #{tpu_custom_call.1} parent=35 // pred_region
          %294 = dma.done [#allocation6], 24576
        $region48: #{tpu_custom_call.1} parent=35 // pred_fallthru
          _
        // Predicated region
        $region49: #{tpu_custom_call.1} parent=35 // pred_check
          %p295 = pneg %p134
        $region50: #{tpu_custom_call.1} parent=35 // pred_check_branch
          %297 = sbr.rel (%p295) target = $region52
        $region51: #{tpu_custom_call.1} parent=35 // pred_region
          %299 = dma.done [#allocation9], 3072
        $region52: #{tpu_custom_call.1} parent=35 // pred_fallthru
          _
        %s300 = sand.u32 %s47, 1
        %s301 = scalar_lea.sflag [#allocation3], %s300
        %s302 = sand.u32 %s47, 1
        %s303 = smul.addr %s302, 72
        %s304 = scalar_lea.vmem [#allocation2], %s303
        %p305 = pneg %p60
        %p306 = pneg %p57
        %s307 = sand.u32 %s25, 1
        %s308 = scalar_lea.sflag [#allocation6], %s307
        %s309 = sand.u32 %s79, 1
        %s310 = smul.addr %s309, 8
        %s311 = scalar_lea.vmem [#allocation5], %s310
        %p312 = pneg %p92
        %p313 = pneg %p89
        %p314 = pneg %p113
        %p315 = pneg %p110
        %p316 = pneg %p134
        %p317 = pneg %p131
        %p318 = pneg %p162
        %p319 = pneg %p159
        %s320 = sand.u32 %s149, 1
        %s321 = scalar_lea.sflag [#allocation4], %s320
        %s322 = sand.u32 %s149, 1
        %s323 = smul.addr %s322, 72
        %s324 = scalar_lea.vmem [#allocation10], %s323
        %s325 = smul.u32 9, %s30
        %s326 = ssub.s32 10, %s325
        %p327 = scmp.lt.s32.totalorder %s326, 9
        %s328 = scalar_select %p327, %s326, 9
        %s329 = smul.u32 8, %s328
        %s330 = sadd.s32 %s30, 1
        %s331 = smul.u32 %s330, 9
        %s332 = smul.u32 9, %s30
        %v333 = vld [vmem:[%s274] sm:$0xff]
        %v334 = vld [vmem:[%s274 + $0x8] sm:$0xff]
        %v335 = vld [vmem:[%s274 + $0x10] sm:$0xff]
        %v336 = vld [vmem:[%s274 + $0x18] sm:$0xff]
        %v337 = vld [vmem:[%s274 + $0x20] sm:$0xff]
        %v338 = vld [vmem:[%s274 + $0x28] sm:$0xff]
        %v339 = vld [vmem:[%s274 + $0x30] sm:$0xff]
        %v340 = vld [vmem:[%s274 + $0x38] sm:$0xff]
        %v341 = vld [vmem:[%s274 + $0x40] sm:$0xff]
        %v342 = vld [vmem:[%s284] sm:$0xff]
        %v343 = vpack.c.bf16 %v334, %v333
        %v344 = vpack.c.bf16 %v336, %v335
        %v345 = vpack.c.bf16 %v338, %v337
        %v346 = vpack.c.bf16 %v340, %v339
        %v347 = vpack.c.bf16 %v341, %v341
        %v348 = vld [vmem:[#allocation7] sm:$0xff]
        %v349 = vld [vmem:[#allocation7 + $0x8] sm:$0xff]
        %v350 = vld [vmem:[#allocation7 + $0x10] sm:$0xff]
        %v351 = vld [vmem:[#allocation7 + $0x18] sm:$0xff]
        %v352 = vld [vmem:[#allocation7 + $0x20] sm:$0xff]
        %v353 = vld [vmem:[#allocation7 + $0x28] sm:$0xff]
        %v354 = vld [vmem:[#allocation7 + $0x30] sm:$0xff]
        %v355 = vld [vmem:[#allocation7 + $0x38] sm:$0xff]
        %v356 = vld [vmem:[#allocation7 + $0x40] sm:$0xff]
        %v357 = vld [vmem:[#allocation7 + $0x48] sm:$0xff]
        %v358 = vld [vmem:[#allocation7 + $0x50] sm:$0xff]
        %v359 = vld [vmem:[#allocation7 + $0x58] sm:$0xff]
        %v360 = vld [vmem:[#allocation7 + $0x60] sm:$0xff]
        %v361 = vld [vmem:[#allocation7 + $0x68] sm:$0xff]
        %v362 = vld [vmem:[#allocation7 + $0x70] sm:$0xff]
        %v363 = vld [vmem:[#allocation7 + $0x78] sm:$0xff]
        %v364 = vld [vmem:[#allocation7 + $0x80] sm:$0xff]
        %v365 = vld [vmem:[#allocation7 + $0x88] sm:$0xff]
        %v366 = vld [vmem:[#allocation7 + $0x90] sm:$0xff]
        %v367 = vld [vmem:[#allocation7 + $0x98] sm:$0xff]
        %v368 = vld [vmem:[#allocation7 + $0xa0] sm:$0xff]
        %v369 = vld [vmem:[#allocation7 + $0xa8] sm:$0xff]
        %v370 = vld [vmem:[#allocation7 + $0xb0] sm:$0xff]
        %v371 = vld [vmem:[#allocation7 + $0xb8] sm:$0xff]
        %v372 = vld [vmem:[#allocation7 + $0xc0] sm:$0xff]
        %v373 = vld [vmem:[#allocation7 + $0xc8] sm:$0xff]
        %v374 = vld [vmem:[#allocation7 + $0xd0] sm:$0xff]
        %v375 = vld [vmem:[#allocation7 + $0xd8] sm:$0xff]
        %v376 = vld [vmem:[#allocation7 + $0xe0] sm:$0xff]
        %v377 = vld [vmem:[#allocation7 + $0xe8] sm:$0xff]
        %v378 = vld [vmem:[#allocation7 + $0xf0] sm:$0xff]
        %v379 = vld [vmem:[#allocation7 + $0xf8] sm:$0xff]
        %v380 = vld [vmem:[#allocation7 + $0x100] sm:$0xff]
        %v381 = vld [vmem:[#allocation7 + $0x108] sm:$0xff]
        %v382 = vld [vmem:[#allocation7 + $0x110] sm:$0xff]
        %v383 = vld [vmem:[#allocation7 + $0x118] sm:$0xff]
        %v384 = vld [vmem:[#allocation7 + $0x120] sm:$0xff]
        %v385 = vld [vmem:[#allocation7 + $0x128] sm:$0xff]
        %v386 = vld [vmem:[#allocation7 + $0x130] sm:$0xff]
        %v387 = vld [vmem:[#allocation7 + $0x138] sm:$0xff]
        %v388 = vld [vmem:[#allocation7 + $0x140] sm:$0xff]
        %v389 = vld [vmem:[#allocation7 + $0x148] sm:$0xff]
        %v390 = vld [vmem:[#allocation7 + $0x150] sm:$0xff]
        %v391 = vld [vmem:[#allocation7 + $0x158] sm:$0xff]
        %v392 = vld [vmem:[#allocation7 + $0x160] sm:$0xff]
        %v393 = vld [vmem:[#allocation7 + $0x168] sm:$0xff]
        %v394 = vld [vmem:[#allocation7 + $0x170] sm:$0xff]
        %v395 = vld [vmem:[#allocation7 + $0x178] sm:$0xff]
        %v396 = vpack.c.bf16 %v342, %v341
        %v397 = vld [vmem:[#allocation7 + $0x180] sm:$0xff]
        %v398 = vld [vmem:[#allocation7 + $0x188] sm:$0xff]
        %v399 = vld [vmem:[#allocation7 + $0x190] sm:$0xff]
        %v400 = vld [vmem:[#allocation7 + $0x198] sm:$0xff]
        %v401 = vld [vmem:[#allocation7 + $0x1a0] sm:$0xff]
        %v402 = vld [vmem:[#allocation7 + $0x1a8] sm:$0xff]
        %v403 = vld [vmem:[#allocation7 + $0x1b0] sm:$0xff]
        %v404 = vld [vmem:[#allocation7 + $0x1b8] sm:$0xff]
        %v405 = vld [vmem:[#allocation7 + $0x1c0] sm:$0xff]
        %v406 = vld [vmem:[#allocation7 + $0x1c8] sm:$0xff]
        %v407 = vld [vmem:[#allocation7 + $0x1d0] sm:$0xff]
        %v408 = vld [vmem:[#allocation7 + $0x1d8] sm:$0xff]
        %v409 = vld [vmem:[#allocation7 + $0x1e0] sm:$0xff]
        %v410 = vld [vmem:[#allocation7 + $0x1e8] sm:$0xff]
        %v411 = vld [vmem:[#allocation7 + $0x1f0] sm:$0xff]
        %v412 = vld [vmem:[#allocation7 + $0x1f8] sm:$0xff]
        %v413 = vld [vmem:[#allocation7 + $0x200] sm:$0xff]
        %v414 = vld [vmem:[#allocation7 + $0x208] sm:$0xff]
        %v415 = vld [vmem:[#allocation7 + $0x210] sm:$0xff]
        %v416 = vld [vmem:[#allocation7 + $0x218] sm:$0xff]
        %v417 = vld [vmem:[#allocation7 + $0x220] sm:$0xff]
        %v418 = vld [vmem:[#allocation7 + $0x228] sm:$0xff]
        %v419 = vld [vmem:[#allocation7 + $0x230] sm:$0xff]
        %v420 = vld [vmem:[#allocation7 + $0x238] sm:$0xff]
        %v421 = vld [vmem:[#allocation7 + $0x240] sm:$0xff]
        %v422 = vld [vmem:[#allocation7 + $0x248] sm:$0xff]
        %v423 = vld [vmem:[#allocation7 + $0x250] sm:$0xff]
        %v424 = vld [vmem:[#allocation7 + $0x258] sm:$0xff]
        %v425 = vld [vmem:[#allocation7 + $0x260] sm:$0xff]
        %v426 = vld [vmem:[#allocation7 + $0x268] sm:$0xff]
        %v427 = vld [vmem:[#allocation7 + $0x270] sm:$0xff]
        %v428 = vld [vmem:[#allocation7 + $0x278] sm:$0xff]
        %v429 = vld [vmem:[#allocation7 + $0x280] sm:$0xff]
        %v430 = vld [vmem:[#allocation7 + $0x288] sm:$0xff]
        %v431 = vld [vmem:[#allocation7 + $0x290] sm:$0xff]
        %v432 = vld [vmem:[#allocation7 + $0x298] sm:$0xff]
        %v433 = vld [vmem:[#allocation7 + $0x2a0] sm:$0xff]
        %v434 = vld [vmem:[#allocation7 + $0x2a8] sm:$0xff]
        %v435 = vld [vmem:[#allocation7 + $0x2b0] sm:$0xff]
        %v436 = vld [vmem:[#allocation7 + $0x2b8] sm:$0xff]
        %v437 = vld [vmem:[#allocation7 + $0x2c0] sm:$0xff]
        %v438 = vld [vmem:[#allocation7 + $0x2c8] sm:$0xff]
        %v439 = vld [vmem:[#allocation7 + $0x2d0] sm:$0xff]
        %v440 = vld [vmem:[#allocation7 + $0x2d8] sm:$0xff]
        %v441 = vld [vmem:[#allocation7 + $0x2e0] sm:$0xff]
        %v442 = vld [vmem:[#allocation7 + $0x2e8] sm:$0xff]
        %v443 = vld [vmem:[#allocation7 + $0x2f0] sm:$0xff]
        %v444 = vld [vmem:[#allocation7 + $0x2f8] sm:$0xff]
        %vm445 = vsmask.f32 7424
        %v447 = vshrl.u32 %v343, 16
        %v449 = vshll.u32 %v343, 16
        %v451 = vrot.slane %v449, 1
        %v452 = vor.u32 %v447, %v451
        %v454 = vshll.u32 %v344, 16
        %v456 = vrot.slane %v454, 1
        %v457 = vsel %vm445, %v452, %v456
        %v458 = vshrl.u32 %v344, 16
        %v460 = vor.u32 %v458, %v456
        %v462 = vshll.u32 %v345, 16
        %v464 = vrot.slane %v462, 1
        %v465 = vsel %vm445, %v460, %v464
        %v466 = vshrl.u32 %v345, 16
        %v468 = vor.u32 %v466, %v464
        %v470 = vshll.u32 %v346, 16
        %v472 = vrot.slane %v470, 1
        %v473 = vsel %vm445, %v468, %v472
        %v474 = vshrl.u32 %v346, 16
        %v476 = vor.u32 %v474, %v472
        %v478 = vshll.u32 %v396, 16
        %v480 = vrot.slane %v478, 1
        %v481 = vsel %vm445, %v476, %v480
        %v482 = vshrl.u32 %v396, 16
        %v484 = vor.u32 %v482, %v480
        %v538 = vunpack.c.l.b16 %v397
        %v539 = vunpack.c.h.b16 %v397
        %v540 = vunpack.c.l.b16 %v398
        %v541 = vunpack.c.h.b16 %v398
        %v542 = vunpack.c.l.b16 %v399
        %v543 = vunpack.c.h.b16 %v399
        %v544 = vunpack.c.l.b16 %v400
        %v545 = vunpack.c.h.b16 %v400
        %v546 = vunpack.c.l.b16 %v401
        %v547 = vunpack.c.h.b16 %v401
        %v548 = vunpack.c.l.b16 %v402
        %v549 = vunpack.c.h.b16 %v402
        %v550 = vunpack.c.l.b16 %v403
        %v551 = vunpack.c.h.b16 %v403
        %v552 = vunpack.c.l.b16 %v404
        %v553 = vunpack.c.h.b16 %v404
        %v554 = vunpack.c.l.b16 %v405
        %v555 = vunpack.c.h.b16 %v405
        %v556 = vunpack.c.l.b16 %v406
        %v557 = vunpack.c.h.b16 %v406
        %v558 = vunpack.c.l.b16 %v407
        %v559 = vunpack.c.h.b16 %v407
        %v560 = vunpack.c.l.b16 %v408
        %v561 = vunpack.c.h.b16 %v408
        %v562 = vunpack.c.l.b16 %v409
        %v563 = vunpack.c.h.b16 %v409
        %v564 = vunpack.c.l.b16 %v410
        %v565 = vunpack.c.h.b16 %v410
        %v566 = vunpack.c.l.b16 %v411
        %v567 = vunpack.c.h.b16 %v411
        %v568 = vunpack.c.l.b16 %v412
        %v569 = vunpack.c.h.b16 %v412
        %v570 = vunpack.c.l.b16 %v413
        %v571 = vunpack.c.h.b16 %v413
        %v572 = vunpack.c.l.b16 %v414
        %v573 = vunpack.c.h.b16 %v414
        %v574 = vunpack.c.l.b16 %v415
        %v575 = vunpack.c.h.b16 %v415
        %v576 = vunpack.c.l.b16 %v416
        %v577 = vunpack.c.h.b16 %v416
        %v578 = vunpack.c.l.b16 %v417
        %v579 = vunpack.c.h.b16 %v417
        %v580 = vunpack.c.l.b16 %v418
        %v581 = vunpack.c.h.b16 %v418
        %v582 = vunpack.c.l.b16 %v419
        %v583 = vunpack.c.h.b16 %v419
        %v584 = vunpack.c.l.b16 %v420
        %v585 = vunpack.c.h.b16 %v420
        %v586 = vunpack.c.l.b16 %v421
        %v587 = vunpack.c.h.b16 %v421
        %v588 = vunpack.c.l.b16 %v422
        %v589 = vunpack.c.h.b16 %v422
        %v590 = vunpack.c.l.b16 %v423
        %v591 = vunpack.c.h.b16 %v423
        %v592 = vunpack.c.l.b16 %v424
        %v593 = vunpack.c.h.b16 %v424
        %v594 = vunpack.c.l.b16 %v425
        %v595 = vunpack.c.h.b16 %v425
        %v596 = vunpack.c.l.b16 %v426
        %v597 = vunpack.c.h.b16 %v426
        %v598 = vunpack.c.l.b16 %v427
        %v599 = vunpack.c.h.b16 %v427
        %v600 = vunpack.c.l.b16 %v428
        %v601 = vunpack.c.h.b16 %v428
        %v602 = vunpack.c.l.b16 %v429
        %v603 = vunpack.c.h.b16 %v429
        %v604 = vunpack.c.l.b16 %v430
        %v605 = vunpack.c.h.b16 %v430
        %v606 = vunpack.c.l.b16 %v431
        %v607 = vunpack.c.h.b16 %v431
        %v608 = vunpack.c.l.b16 %v432
        %v609 = vunpack.c.h.b16 %v432
        %v610 = vunpack.c.l.b16 %v433
        %v611 = vunpack.c.h.b16 %v433
        %v612 = vunpack.c.l.b16 %v434
        %v613 = vunpack.c.h.b16 %v434
        %v614 = vunpack.c.l.b16 %v435
        %v615 = vunpack.c.h.b16 %v435
        %v616 = vunpack.c.l.b16 %v436
        %v617 = vunpack.c.h.b16 %v436
        %v618 = vunpack.c.l.b16 %v437
        %v619 = vunpack.c.h.b16 %v437
        %v620 = vunpack.c.l.b16 %v438
        %v621 = vunpack.c.h.b16 %v438
        %v622 = vunpack.c.l.b16 %v439
        %v623 = vunpack.c.h.b16 %v439
        %v624 = vunpack.c.l.b16 %v440
        %v625 = vunpack.c.h.b16 %v440
        %v626 = vunpack.c.l.b16 %v441
        %v627 = vunpack.c.h.b16 %v441
        %v628 = vunpack.c.l.b16 %v442
        %v629 = vunpack.c.h.b16 %v442
        %v630 = vunpack.c.l.b16 %v443
        %v631 = vunpack.c.h.b16 %v443
        %v632 = vunpack.c.l.b16 %v444
        %v633 = vunpack.c.h.b16 %v444
        %v634 = vpack.c.b16 %v544, %v538
        %v635 = vpack.c.b16 %v545, %v539
        %v636 = vpack.c.b16 %v546, %v540
        %v637 = vpack.c.b16 %v547, %v541
        %v638 = vpack.c.b16 %v548, %v542
        %v639 = vpack.c.b16 %v549, %v543
        %v640 = vpack.c.b16 %v556, %v550
        %v641 = vpack.c.b16 %v557, %v551
        %v642 = vpack.c.b16 %v558, %v552
        %v643 = vpack.c.b16 %v559, %v553
        %v644 = vpack.c.b16 %v560, %v554
        %v645 = vpack.c.b16 %v561, %v555
        %v646 = vpack.c.b16 %v568, %v562
        %v647 = vpack.c.b16 %v569, %v563
        %v648 = vpack.c.b16 %v570, %v564
        %v649 = vpack.c.b16 %v571, %v565
        %v650 = vpack.c.b16 %v572, %v566
        %v651 = vpack.c.b16 %v573, %v567
        %v652 = vpack.c.b16 %v580, %v574
        %v653 = vpack.c.b16 %v581, %v575
        %v654 = vpack.c.b16 %v582, %v576
        %v655 = vpack.c.b16 %v583, %v577
        %v656 = vpack.c.b16 %v584, %v578
        %v657 = vpack.c.b16 %v585, %v579
        %v658 = vpack.c.b16 %v592, %v586
        %v659 = vpack.c.b16 %v593, %v587
        %v660 = vpack.c.b16 %v594, %v588
        %v661 = vpack.c.b16 %v595, %v589
        %v662 = vpack.c.b16 %v596, %v590
        %v663 = vpack.c.b16 %v597, %v591
        %v664 = vpack.c.b16 %v604, %v598
        %v665 = vpack.c.b16 %v605, %v599
        %v666 = vpack.c.b16 %v606, %v600
        %v667 = vpack.c.b16 %v607, %v601
        %v668 = vpack.c.b16 %v608, %v602
        %v669 = vpack.c.b16 %v609, %v603
        %v670 = vpack.c.b16 %v616, %v610
        %v671 = vpack.c.b16 %v617, %v611
        %v672 = vpack.c.b16 %v618, %v612
        %v673 = vpack.c.b16 %v619, %v613
        %v674 = vpack.c.b16 %v620, %v614
        %v675 = vpack.c.b16 %v621, %v615
        %v676 = vpack.c.b16 %v628, %v622
        %v677 = vpack.c.b16 %v629, %v623
        %v678 = vpack.c.b16 %v630, %v624
        %v679 = vpack.c.b16 %v631, %v625
        %v680 = vpack.c.b16 %v632, %v626
        %v681 = vpack.c.b16 %v633, %v627
        %730 = vmatpush.bf16.msra.mxu0 %v676
        %731 = vmatpush.bf16.msra.mxu0 %v670
        %732 = vmatpush.bf16.msra.mxu0 %v664
        %733 = vmatpush.bf16.msra.mxu0 %v658
        %734 = vmatpush.bf16.msra.mxu0 %v652
        %735 = vmatpush.bf16.msra.mxu0 %v646
        %736 = vmatpush.bf16.msra.mxu0 %v640
        %737 = vmatpush.bf16.msra.mxu0 %v634
        %738 = vmatmul.bf16.gmra.mxu0 %v457
        %v739 = vpop.f32.mrf.mxu0
        %v740 = vadd.f32 0.0, %v739
        %v741 = vpop.f32.mrf.mxu0
        %v742 = vadd.f32 0.0, %v741
        %743 = vmatmul.bf16.gmra.mxu0 %v465
        %v744 = vpop.f32.mrf.mxu0
        %v745 = vadd.f32 0.0, %v744
        %v746 = vpop.f32.mrf.mxu0
        %v747 = vadd.f32 0.0, %v746
        %748 = vmatmul.bf16.gmra.mxu0 %v473
        %v749 = vpop.f32.mrf.mxu0
        %v750 = vadd.f32 0.0, %v749
        %v751 = vpop.f32.mrf.mxu0
        %v752 = vadd.f32 0.0, %v751
        %753 = vmatmul.bf16.gmra.mxu0 %v481
        %v754 = vpop.f32.mrf.mxu0
        %v755 = vadd.f32 0.0, %v754
        %v756 = vpop.f32.mrf.mxu0
        %v757 = vadd.f32 0.0, %v756
        %758 = vmatmul.bf16.gmra.mxu0 %v484
        %v759 = vpop.f32.mrf.mxu0
        %v760 = vadd.f32 0.0, %v759
        %v761 = vpop.f32.mrf.mxu0
        %762 = vdwg.mxu0
        %763 = vmatpush.bf16.msra.mxu0 %v677
        %764 = vmatpush.bf16.msra.mxu0 %v671
        %765 = vmatpush.bf16.msra.mxu0 %v665
        %766 = vmatpush.bf16.msra.mxu0 %v659
        %767 = vmatpush.bf16.msra.mxu0 %v653
        %768 = vmatpush.bf16.msra.mxu0 %v647
        %769 = vmatpush.bf16.msra.mxu0 %v641
        %770 = vmatpush.bf16.msra.mxu0 %v635
        %771 = vmatmul.bf16.gmra.mxu0 %v457
        %v772 = vpop.f32.mrf.mxu0
        %v773 = vadd.f32 0.0, %v772
        %v774 = vpop.f32.mrf.mxu0
        %v775 = vadd.f32 0.0, %v774
        %776 = vmatmul.bf16.gmra.mxu0 %v465
        %v777 = vpop.f32.mrf.mxu0
        %v778 = vadd.f32 0.0, %v777
        %v779 = vpop.f32.mrf.mxu0
        %v780 = vadd.f32 0.0, %v779
        %781 = vmatmul.bf16.gmra.mxu0 %v473
        %v782 = vpop.f32.mrf.mxu0
        %v783 = vadd.f32 0.0, %v782
        %v784 = vpop.f32.mrf.mxu0
        %v785 = vadd.f32 0.0, %v784
        %786 = vmatmul.bf16.gmra.mxu0 %v481
        %v787 = vpop.f32.mrf.mxu0
        %v788 = vadd.f32 0.0, %v787
        %v789 = vpop.f32.mrf.mxu0
        %v790 = vadd.f32 0.0, %v789
        %791 = vmatmul.bf16.gmra.mxu0 %v484
        %v792 = vpop.f32.mrf.mxu0
        %v793 = vadd.f32 0.0, %v792
        %v794 = vpop.f32.mrf.mxu0
        %795 = vdwg.mxu0
        %796 = vmatpush.bf16.msra.mxu0 %v678
        %797 = vmatpush.bf16.msra.mxu0 %v672
        %798 = vmatpush.bf16.msra.mxu0 %v666
        %799 = vmatpush.bf16.msra.mxu0 %v660
        %800 = vmatpush.bf16.msra.mxu0 %v654
        %801 = vmatpush.bf16.msra.mxu0 %v648
        %802 = vmatpush.bf16.msra.mxu0 %v642
        %803 = vmatpush.bf16.msra.mxu0 %v636
        %804 = vmatmul.bf16.gmra.mxu0 %v457
        %v805 = vpop.f32.mrf.mxu0
        %v806 = vadd.f32 0.0, %v805
        %v807 = vpop.f32.mrf.mxu0
        %v808 = vadd.f32 0.0, %v807
        %809 = vmatmul.bf16.gmra.mxu0 %v465
        %v810 = vpop.f32.mrf.mxu0
        %v811 = vadd.f32 0.0, %v810
        %v812 = vpop.f32.mrf.mxu0
        %v813 = vadd.f32 0.0, %v812
        %814 = vmatmul.bf16.gmra.mxu0 %v473
        %v815 = vpop.f32.mrf.mxu0
        %v816 = vadd.f32 0.0, %v815
        %v817 = vpop.f32.mrf.mxu0
        %v818 = vadd.f32 0.0, %v817
        %819 = vmatmul.bf16.gmra.mxu0 %v481
        %v820 = vpop.f32.mrf.mxu0
        %v821 = vadd.f32 0.0, %v820
        %v822 = vpop.f32.mrf.mxu0
        %v823 = vadd.f32 0.0, %v822
        %824 = vmatmul.bf16.gmra.mxu0 %v484
        %v825 = vpop.f32.mrf.mxu0
        %v826 = vadd.f32 0.0, %v825
        %v827 = vpop.f32.mrf.mxu0
        %828 = vdwg.mxu0
        %829 = vmatpush.bf16.msra.mxu0 %v679
        %830 = vmatpush.bf16.msra.mxu0 %v673
        %831 = vmatpush.bf16.msra.mxu0 %v667
        %832 = vmatpush.bf16.msra.mxu0 %v661
        %833 = vmatpush.bf16.msra.mxu0 %v655
        %834 = vmatpush.bf16.msra.mxu0 %v649
        %835 = vmatpush.bf16.msra.mxu0 %v643
        %836 = vmatpush.bf16.msra.mxu0 %v637
        %837 = vmatmul.bf16.gmra.mxu0 %v457
        %v838 = vpop.f32.mrf.mxu0
        %v839 = vadd.f32 0.0, %v838
        %v840 = vpop.f32.mrf.mxu0
        %v841 = vadd.f32 0.0, %v840
        %842 = vmatmul.bf16.gmra.mxu0 %v465
        %v843 = vpop.f32.mrf.mxu0
        %v844 = vadd.f32 0.0, %v843
        %v845 = vpop.f32.mrf.mxu0
        %v846 = vadd.f32 0.0, %v845
        %847 = vmatmul.bf16.gmra.mxu0 %v473
        %v848 = vpop.f32.mrf.mxu0
        %v849 = vadd.f32 0.0, %v848
        %v850 = vpop.f32.mrf.mxu0
        %v851 = vadd.f32 0.0, %v850
        %852 = vmatmul.bf16.gmra.mxu0 %v481
        %v853 = vpop.f32.mrf.mxu0
        %v854 = vadd.f32 0.0, %v853
        %v855 = vpop.f32.mrf.mxu0
        %v856 = vadd.f32 0.0, %v855
        %857 = vmatmul.bf16.gmra.mxu0 %v484
        %v858 = vpop.f32.mrf.mxu0
        %v859 = vadd.f32 0.0, %v858
        %v860 = vpop.f32.mrf.mxu0
        %861 = vdwg.mxu0
        %862 = vmatpush.bf16.msra.mxu0 %v680
        %863 = vmatpush.bf16.msra.mxu0 %v674
        %864 = vmatpush.bf16.msra.mxu0 %v668
        %865 = vmatpush.bf16.msra.mxu0 %v662
        %866 = vmatpush.bf16.msra.mxu0 %v656
        %867 = vmatpush.bf16.msra.mxu0 %v650
        %868 = vmatpush.bf16.msra.mxu0 %v644
        %869 = vmatpush.bf16.msra.mxu0 %v638
        %870 = vmatmul.bf16.gmra.mxu0 %v457
        %v871 = vpop.f32.mrf.mxu0
        %v872 = vadd.f32 0.0, %v871
        %v873 = vpop.f32.mrf.mxu0
        %v874 = vadd.f32 0.0, %v873
        %875 = vmatmul.bf16.gmra.mxu0 %v465
        %v876 = vpop.f32.mrf.mxu0
        %v877 = vadd.f32 0.0, %v876
        %v878 = vpop.f32.mrf.mxu0
        %v879 = vadd.f32 0.0, %v878
        %880 = vmatmul.bf16.gmra.mxu0 %v473
        %v881 = vpop.f32.mrf.mxu0
        %v882 = vadd.f32 0.0, %v881
        %v883 = vpop.f32.mrf.mxu0
        %v884 = vadd.f32 0.0, %v883
        %885 = vmatmul.bf16.gmra.mxu0 %v481
        %v886 = vpop.f32.mrf.mxu0
        %v887 = vadd.f32 0.0, %v886
        %v888 = vpop.f32.mrf.mxu0
        %v889 = vadd.f32 0.0, %v888
        %890 = vmatmul.bf16.gmra.mxu0 %v484
        %v891 = vpop.f32.mrf.mxu0
        %v892 = vadd.f32 0.0, %v891
        %v893 = vpop.f32.mrf.mxu0
        %894 = vdwg.mxu0
        %895 = vmatpush.bf16.msra.mxu0 %v681
        %896 = vmatpush.bf16.msra.mxu0 %v675
        %897 = vmatpush.bf16.msra.mxu0 %v669
        %898 = vmatpush.bf16.msra.mxu0 %v663
        %899 = vmatpush.bf16.msra.mxu0 %v657
        %900 = vmatpush.bf16.msra.mxu0 %v651
        %901 = vmatpush.bf16.msra.mxu0 %v645
        %902 = vmatpush.bf16.msra.mxu0 %v639
        %903 = vmatmul.bf16.gmra.mxu0 %v457
        %v904 = vpop.f32.mrf.mxu0
        %v905 = vadd.f32 0.0, %v904
        %v906 = vpop.f32.mrf.mxu0
        %v907 = vadd.f32 0.0, %v906
        %908 = vmatmul.bf16.gmra.mxu0 %v465
        %v909 = vpop.f32.mrf.mxu0
        %v910 = vadd.f32 0.0, %v909
        %v911 = vpop.f32.mrf.mxu0
        %v912 = vadd.f32 0.0, %v911
        %913 = vmatmul.bf16.gmra.mxu0 %v473
        %v914 = vpop.f32.mrf.mxu0
        %v915 = vadd.f32 0.0, %v914
        %v916 = vpop.f32.mrf.mxu0
        %v917 = vadd.f32 0.0, %v916
        %918 = vmatmul.bf16.gmra.mxu0 %v481
        %v919 = vpop.f32.mrf.mxu0
        %v920 = vadd.f32 0.0, %v919
        %v921 = vpop.f32.mrf.mxu0
        %v922 = vadd.f32 0.0, %v921
        %923 = vmatmul.bf16.gmra.mxu0 %v484
        %v924 = vpop.f32.mrf.mxu0
        %v925 = vadd.f32 0.0, %v924
        %v926 = vpop.f32.mrf.mxu0
        %927 = vdwg.mxu0
        %v976 = vunpack.c.l.b16 %v348
        %v977 = vunpack.c.h.b16 %v348
        %v978 = vunpack.c.l.b16 %v349
        %v979 = vunpack.c.h.b16 %v349
        %v980 = vunpack.c.l.b16 %v350
        %v981 = vunpack.c.h.b16 %v350
        %v982 = vunpack.c.l.b16 %v351
        %v983 = vunpack.c.h.b16 %v351
        %v984 = vunpack.c.l.b16 %v352
        %v985 = vunpack.c.h.b16 %v352
        %v986 = vunpack.c.l.b16 %v353
        %v987 = vunpack.c.h.b16 %v353
        %v988 = vunpack.c.l.b16 %v354
        %v989 = vunpack.c.h.b16 %v354
        %v990 = vunpack.c.l.b16 %v355
        %v991 = vunpack.c.h.b16 %v355
        %v992 = vunpack.c.l.b16 %v356
        %v993 = vunpack.c.h.b16 %v356
        %v994 = vunpack.c.l.b16 %v357
        %v995 = vunpack.c.h.b16 %v357
        %v996 = vunpack.c.l.b16 %v358
        %v997 = vunpack.c.h.b16 %v358
        %v998 = vunpack.c.l.b16 %v359
        %v999 = vunpack.c.h.b16 %v359
        %v1000 = vunpack.c.l.b16 %v360
        %v1001 = vunpack.c.h.b16 %v360
        %v1002 = vunpack.c.l.b16 %v361
        %v1003 = vunpack.c.h.b16 %v361
        %v1004 = vunpack.c.l.b16 %v362
        %v1005 = vunpack.c.h.b16 %v362
        %v1006 = vunpack.c.l.b16 %v363
        %v1007 = vunpack.c.h.b16 %v363
        %v1008 = vunpack.c.l.b16 %v364
        %v1009 = vunpack.c.h.b16 %v364
        %v1010 = vunpack.c.l.b16 %v365
        %v1011 = vunpack.c.h.b16 %v365
        %v1012 = vunpack.c.l.b16 %v366
        %v1013 = vunpack.c.h.b16 %v366
        %v1014 = vunpack.c.l.b16 %v367
        %v1015 = vunpack.c.h.b16 %v367
        %v1016 = vunpack.c.l.b16 %v368
        %v1017 = vunpack.c.h.b16 %v368
        %v1018 = vunpack.c.l.b16 %v369
        %v1019 = vunpack.c.h.b16 %v369
        %v1020 = vunpack.c.l.b16 %v370
        %v1021 = vunpack.c.h.b16 %v370
        %v1022 = vunpack.c.l.b16 %v371
        %v1023 = vunpack.c.h.b16 %v371
        %v1024 = vunpack.c.l.b16 %v372
        %v1025 = vunpack.c.h.b16 %v372
        %v1026 = vunpack.c.l.b16 %v373
        %v1027 = vunpack.c.h.b16 %v373
        %v1028 = vunpack.c.l.b16 %v374
        %v1029 = vunpack.c.h.b16 %v374
        %v1030 = vunpack.c.l.b16 %v375
        %v1031 = vunpack.c.h.b16 %v375
        %v1032 = vunpack.c.l.b16 %v376
        %v1033 = vunpack.c.h.b16 %v376
        %v1034 = vunpack.c.l.b16 %v377
        %v1035 = vunpack.c.h.b16 %v377
        %v1036 = vunpack.c.l.b16 %v378
        %v1037 = vunpack.c.h.b16 %v378
        %v1038 = vunpack.c.l.b16 %v379
        %v1039 = vunpack.c.h.b16 %v379
        %v1040 = vunpack.c.l.b16 %v380
        %v1041 = vunpack.c.h.b16 %v380
        %v1042 = vunpack.c.l.b16 %v381
        %v1043 = vunpack.c.h.b16 %v381
        %v1044 = vunpack.c.l.b16 %v382
        %v1045 = vunpack.c.h.b16 %v382
        %v1046 = vunpack.c.l.b16 %v383
        %v1047 = vunpack.c.h.b16 %v383
        %v1048 = vunpack.c.l.b16 %v384
        %v1049 = vunpack.c.h.b16 %v384
        %v1050 = vunpack.c.l.b16 %v385
        %v1051 = vunpack.c.h.b16 %v385
        %v1052 = vunpack.c.l.b16 %v386
        %v1053 = vunpack.c.h.b16 %v386
        %v1054 = vunpack.c.l.b16 %v387
        %v1055 = vunpack.c.h.b16 %v387
        %v1056 = vunpack.c.l.b16 %v388
        %v1057 = vunpack.c.h.b16 %v388
        %v1058 = vunpack.c.l.b16 %v389
        %v1059 = vunpack.c.h.b16 %v389
        %v1060 = vunpack.c.l.b16 %v390
        %v1061 = vunpack.c.h.b16 %v390
        %v1062 = vunpack.c.l.b16 %v391
        %v1063 = vunpack.c.h.b16 %v391
        %v1064 = vunpack.c.l.b16 %v392
        %v1065 = vunpack.c.h.b16 %v392
        %v1066 = vunpack.c.l.b16 %v393
        %v1067 = vunpack.c.h.b16 %v393
        %v1068 = vunpack.c.l.b16 %v394
        %v1069 = vunpack.c.h.b16 %v394
        %v1070 = vunpack.c.l.b16 %v395
        %v1071 = vunpack.c.h.b16 %v395
        %v1072 = vpack.c.b16 %v982, %v976
        %v1073 = vpack.c.b16 %v983, %v977
        %v1074 = vpack.c.b16 %v984, %v978
        %v1075 = vpack.c.b16 %v985, %v979
        %v1076 = vpack.c.b16 %v986, %v980
        %v1077 = vpack.c.b16 %v987, %v981
        %v1078 = vpack.c.b16 %v994, %v988
        %v1079 = vpack.c.b16 %v995, %v989
        %v1080 = vpack.c.b16 %v996, %v990
        %v1081 = vpack.c.b16 %v997, %v991
        %v1082 = vpack.c.b16 %v998, %v992
        %v1083 = vpack.c.b16 %v999, %v993
        %v1084 = vpack.c.b16 %v1006, %v1000
        %v1085 = vpack.c.b16 %v1007, %v1001
        %v1086 = vpack.c.b16 %v1008, %v1002
        %v1087 = vpack.c.b16 %v1009, %v1003
        %v1088 = vpack.c.b16 %v1010, %v1004
        %v1089 = vpack.c.b16 %v1011, %v1005
        %v1090 = vpack.c.b16 %v1018, %v1012
        %v1091 = vpack.c.b16 %v1019, %v1013
        %v1092 = vpack.c.b16 %v1020, %v1014
        %v1093 = vpack.c.b16 %v1021, %v1015
        %v1094 = vpack.c.b16 %v1022, %v1016
        %v1095 = vpack.c.b16 %v1023, %v1017
        %v1096 = vpack.c.b16 %v1030, %v1024
        %v1097 = vpack.c.b16 %v1031, %v1025
        %v1098 = vpack.c.b16 %v1032, %v1026
        %v1099 = vpack.c.b16 %v1033, %v1027
        %v1100 = vpack.c.b16 %v1034, %v1028
        %v1101 = vpack.c.b16 %v1035, %v1029
        %v1102 = vpack.c.b16 %v1042, %v1036
        %v1103 = vpack.c.b16 %v1043, %v1037
        %v1104 = vpack.c.b16 %v1044, %v1038
        %v1105 = vpack.c.b16 %v1045, %v1039
        %v1106 = vpack.c.b16 %v1046, %v1040
        %v1107 = vpack.c.b16 %v1047, %v1041
        %v1108 = vpack.c.b16 %v1054, %v1048
        %v1109 = vpack.c.b16 %v1055, %v1049
        %v1110 = vpack.c.b16 %v1056, %v1050
        %v1111 = vpack.c.b16 %v1057, %v1051
        %v1112 = vpack.c.b16 %v1058, %v1052
        %v1113 = vpack.c.b16 %v1059, %v1053
        %v1114 = vpack.c.b16 %v1066, %v1060
        %v1115 = vpack.c.b16 %v1067, %v1061
        %v1116 = vpack.c.b16 %v1068, %v1062
        %v1117 = vpack.c.b16 %v1069, %v1063
        %v1118 = vpack.c.b16 %v1070, %v1064
        %v1119 = vpack.c.b16 %v1071, %v1065
        %1168 = vmatpush.bf16.msra.mxu0 %v1114
        %1169 = vmatpush.bf16.msra.mxu0 %v1108
        %1170 = vmatpush.bf16.msra.mxu0 %v1102
        %1171 = vmatpush.bf16.msra.mxu0 %v1096
        %1172 = vmatpush.bf16.msra.mxu0 %v1090
        %1173 = vmatpush.bf16.msra.mxu0 %v1084
        %1174 = vmatpush.bf16.msra.mxu0 %v1078
        %1175 = vmatpush.bf16.msra.mxu0 %v1072
        %1176 = vmatmul.bf16.gmra.mxu0 %v343
        %v1177 = vpop.f32.mrf.mxu0
        %v1178 = vadd.f32 %v740, %v1177
        %v1179 = vpop.f32.mrf.mxu0
        %v1180 = vadd.f32 %v742, %v1179
        %1181 = vmatmul.bf16.gmra.mxu0 %v344
        %v1182 = vpop.f32.mrf.mxu0
        %v1183 = vadd.f32 %v745, %v1182
        %v1184 = vpop.f32.mrf.mxu0
        %v1185 = vadd.f32 %v747, %v1184
        %1186 = vmatmul.bf16.gmra.mxu0 %v345
        %v1187 = vpop.f32.mrf.mxu0
        %v1188 = vadd.f32 %v750, %v1187
        %v1189 = vpop.f32.mrf.mxu0
        %v1190 = vadd.f32 %v752, %v1189
        %1191 = vmatmul.bf16.gmra.mxu0 %v346
        %v1192 = vpop.f32.mrf.mxu0
        %v1193 = vadd.f32 %v755, %v1192
        %v1194 = vpop.f32.mrf.mxu0
        %v1195 = vadd.f32 %v757, %v1194
        %1196 = vmatmul.bf16.gmra.mxu0 %v347
        %v1197 = vpop.f32.mrf.mxu0
        %v1198 = vadd.f32 %v760, %v1197
        %v1199 = vpop.f32.mrf.mxu0
        %1200 = vdwg.mxu0
        %1201 = vmatpush.bf16.msra.mxu0 %v1115
        %1202 = vmatpush.bf16.msra.mxu0 %v1109
        %1203 = vmatpush.bf16.msra.mxu0 %v1103
        %1204 = vmatpush.bf16.msra.mxu0 %v1097
        %1205 = vmatpush.bf16.msra.mxu0 %v1091
        %1206 = vmatpush.bf16.msra.mxu0 %v1085
        %1207 = vmatpush.bf16.msra.mxu0 %v1079
        %1208 = vmatpush.bf16.msra.mxu0 %v1073
        %1209 = vmatmul.bf16.gmra.mxu0 %v343
        %v1210 = vpop.f32.mrf.mxu0
        %v1211 = vadd.f32 %v773, %v1210
        %v1212 = vpop.f32.mrf.mxu0
        %v1213 = vadd.f32 %v775, %v1212
        %1214 = vmatmul.bf16.gmra.mxu0 %v344
        %v1215 = vpop.f32.mrf.mxu0
        %v1216 = vadd.f32 %v778, %v1215
        %v1217 = vpop.f32.mrf.mxu0
        %v1218 = vadd.f32 %v780, %v1217
        %1219 = vmatmul.bf16.gmra.mxu0 %v345
        %v1220 = vpop.f32.mrf.mxu0
        %v1221 = vadd.f32 %v783, %v1220
        %v1222 = vpop.f32.mrf.mxu0
        %v1223 = vadd.f32 %v785, %v1222
        %1224 = vmatmul.bf16.gmra.mxu0 %v346
        %v1225 = vpop.f32.mrf.mxu0
        %v1226 = vadd.f32 %v788, %v1225
        %v1227 = vpop.f32.mrf.mxu0
        %v1228 = vadd.f32 %v790, %v1227
        %1229 = vmatmul.bf16.gmra.mxu0 %v347
        %v1230 = vpop.f32.mrf.mxu0
        %v1231 = vadd.f32 %v793, %v1230
        %v1232 = vpop.f32.mrf.mxu0
        %1233 = vdwg.mxu0
        %1234 = vmatpush.bf16.msra.mxu0 %v1116
        %1235 = vmatpush.bf16.msra.mxu0 %v1110
        %1236 = vmatpush.bf16.msra.mxu0 %v1104
        %1237 = vmatpush.bf16.msra.mxu0 %v1098
        %1238 = vmatpush.bf16.msra.mxu0 %v1092
        %1239 = vmatpush.bf16.msra.mxu0 %v1086
        %1240 = vmatpush.bf16.msra.mxu0 %v1080
        %1241 = vmatpush.bf16.msra.mxu0 %v1074
        %1242 = vmatmul.bf16.gmra.mxu0 %v343
        %v1243 = vpop.f32.mrf.mxu0
        %v1244 = vadd.f32 %v806, %v1243
        %v1245 = vpop.f32.mrf.mxu0
        %v1246 = vadd.f32 %v808, %v1245
        %1247 = vmatmul.bf16.gmra.mxu0 %v344
        %v1248 = vpop.f32.mrf.mxu0
        %v1249 = vadd.f32 %v811, %v1248
        %v1250 = vpop.f32.mrf.mxu0
        %v1251 = vadd.f32 %v813, %v1250
        %1252 = vmatmul.bf16.gmra.mxu0 %v345
        %v1253 = vpop.f32.mrf.mxu0
        %v1254 = vadd.f32 %v816, %v1253
        %v1255 = vpop.f32.mrf.mxu0
        %v1256 = vadd.f32 %v818, %v1255
        %1257 = vmatmul.bf16.gmra.mxu0 %v346
        %v1258 = vpop.f32.mrf.mxu0
        %v1259 = vadd.f32 %v821, %v1258
        %v1260 = vpop.f32.mrf.mxu0
        %v1261 = vadd.f32 %v823, %v1260
        %1262 = vmatmul.bf16.gmra.mxu0 %v347
        %v1263 = vpop.f32.mrf.mxu0
        %v1264 = vadd.f32 %v826, %v1263
        %v1265 = vpop.f32.mrf.mxu0
        %1266 = vdwg.mxu0
        %1267 = vmatpush.bf16.msra.mxu0 %v1117
        %1268 = vmatpush.bf16.msra.mxu0 %v1111
        %1269 = vmatpush.bf16.msra.mxu0 %v1105
        %1270 = vmatpush.bf16.msra.mxu0 %v1099
        %1271 = vmatpush.bf16.msra.mxu0 %v1093
        %1272 = vmatpush.bf16.msra.mxu0 %v1087
        %1273 = vmatpush.bf16.msra.mxu0 %v1081
        %1274 = vmatpush.bf16.msra.mxu0 %v1075
        %1275 = vmatmul.bf16.gmra.mxu0 %v343
        %v1276 = vpop.f32.mrf.mxu0
        %v1277 = vadd.f32 %v839, %v1276
        %v1278 = vpop.f32.mrf.mxu0
        %v1279 = vadd.f32 %v841, %v1278
        %1280 = vmatmul.bf16.gmra.mxu0 %v344
        %v1281 = vpop.f32.mrf.mxu0
        %v1282 = vadd.f32 %v844, %v1281
        %v1283 = vpop.f32.mrf.mxu0
        %v1284 = vadd.f32 %v846, %v1283
        %1285 = vmatmul.bf16.gmra.mxu0 %v345
        %v1286 = vpop.f32.mrf.mxu0
        %v1287 = vadd.f32 %v849, %v1286
        %v1288 = vpop.f32.mrf.mxu0
        %v1289 = vadd.f32 %v851, %v1288
        %1290 = vmatmul.bf16.gmra.mxu0 %v346
        %v1291 = vpop.f32.mrf.mxu0
        %v1292 = vadd.f32 %v854, %v1291
        %v1293 = vpop.f32.mrf.mxu0
        %v1294 = vadd.f32 %v856, %v1293
        %1295 = vmatmul.bf16.gmra.mxu0 %v347
        %v1296 = vpop.f32.mrf.mxu0
        %v1297 = vadd.f32 %v859, %v1296
        %v1298 = vpop.f32.mrf.mxu0
        %1299 = vdwg.mxu0
        %1300 = vmatpush.bf16.msra.mxu0 %v1118
        %1301 = vmatpush.bf16.msra.mxu0 %v1112
        %1302 = vmatpush.bf16.msra.mxu0 %v1106
        %1303 = vmatpush.bf16.msra.mxu0 %v1100
        %1304 = vmatpush.bf16.msra.mxu0 %v1094
        %1305 = vmatpush.bf16.msra.mxu0 %v1088
        %1306 = vmatpush.bf16.msra.mxu0 %v1082
        %1307 = vmatpush.bf16.msra.mxu0 %v1076
        %1308 = vmatmul.bf16.gmra.mxu0 %v343
        %v1309 = vpop.f32.mrf.mxu0
        %v1310 = vadd.f32 %v872, %v1309
        %v1311 = vpop.f32.mrf.mxu0
        %v1312 = vadd.f32 %v874, %v1311
        %1313 = vmatmul.bf16.gmra.mxu0 %v344
        %v1314 = vpop.f32.mrf.mxu0
        %v1315 = vadd.f32 %v877, %v1314
        %v1316 = vpop.f32.mrf.mxu0
        %v1317 = vadd.f32 %v879, %v1316
        %1318 = vmatmul.bf16.gmra.mxu0 %v345
        %v1319 = vpop.f32.mrf.mxu0
        %v1320 = vadd.f32 %v882, %v1319
        %v1321 = vpop.f32.mrf.mxu0
        %v1322 = vadd.f32 %v884, %v1321
        %1323 = vmatmul.bf16.gmra.mxu0 %v346
        %v1324 = vpop.f32.mrf.mxu0
        %v1325 = vadd.f32 %v887, %v1324
        %v1326 = vpop.f32.mrf.mxu0
        %v1327 = vadd.f32 %v889, %v1326
        %1328 = vmatmul.bf16.gmra.mxu0 %v347
        %v1329 = vpop.f32.mrf.mxu0
        %v1330 = vadd.f32 %v892, %v1329
        %v1331 = vpop.f32.mrf.mxu0
        %1332 = vdwg.mxu0
        %1333 = vmatpush.bf16.msra.mxu0 %v1119
        %1334 = vmatpush.bf16.msra.mxu0 %v1113
        %1335 = vmatpush.bf16.msra.mxu0 %v1107
        %1336 = vmatpush.bf16.msra.mxu0 %v1101
        %1337 = vmatpush.bf16.msra.mxu0 %v1095
        %1338 = vmatpush.bf16.msra.mxu0 %v1089
        %1339 = vmatpush.bf16.msra.mxu0 %v1083
        %1340 = vmatpush.bf16.msra.mxu0 %v1077
        %1341 = vmatmul.bf16.gmra.mxu0 %v343
        %v1342 = vpop.f32.mrf.mxu0
        %v1343 = vadd.f32 %v905, %v1342
        %v1344 = vpop.f32.mrf.mxu0
        %v1345 = vadd.f32 %v907, %v1344
        %1346 = vmatmul.bf16.gmra.mxu0 %v344
        %v1347 = vpop.f32.mrf.mxu0
        %v1348 = vadd.f32 %v910, %v1347
        %v1349 = vpop.f32.mrf.mxu0
        %v1350 = vadd.f32 %v912, %v1349
        %1351 = vmatmul.bf16.gmra.mxu0 %v345
        %v1352 = vpop.f32.mrf.mxu0
        %v1353 = vadd.f32 %v915, %v1352
        %v1354 = vpop.f32.mrf.mxu0
        %v1355 = vadd.f32 %v917, %v1354
        %1356 = vmatmul.bf16.gmra.mxu0 %v346
        %v1357 = vpop.f32.mrf.mxu0
        %v1358 = vadd.f32 %v920, %v1357
        %v1359 = vpop.f32.mrf.mxu0
        %v1360 = vadd.f32 %v922, %v1359
        %1361 = vmatmul.bf16.gmra.mxu0 %v347
        %v1362 = vpop.f32.mrf.mxu0
        %v1363 = vadd.f32 %v925, %v1362
        %v1364 = vpop.f32.mrf.mxu0
        %1365 = vdwg.mxu0
        %v1366 = vld [vmem:[#allocation7 + $0x300] sm:$0xff]
        %v1367 = vld [vmem:[#allocation7 + $0x308] sm:$0xff]
        %v1368 = vld [vmem:[#allocation7 + $0x310] sm:$0xff]
        %v1369 = vld [vmem:[#allocation7 + $0x318] sm:$0xff]
        %v1370 = vld [vmem:[#allocation7 + $0x320] sm:$0xff]
        %v1371 = vld [vmem:[#allocation7 + $0x328] sm:$0xff]
        %v1372 = vld [vmem:[#allocation7 + $0x330] sm:$0xff]
        %v1373 = vld [vmem:[#allocation7 + $0x338] sm:$0xff]
        %v1374 = vld [vmem:[#allocation7 + $0x340] sm:$0xff]
        %v1375 = vld [vmem:[#allocation7 + $0x348] sm:$0xff]
        %v1376 = vld [vmem:[#allocation7 + $0x350] sm:$0xff]
        %v1377 = vld [vmem:[#allocation7 + $0x358] sm:$0xff]
        %v1378 = vld [vmem:[#allocation7 + $0x360] sm:$0xff]
        %v1379 = vld [vmem:[#allocation7 + $0x368] sm:$0xff]
        %v1380 = vld [vmem:[#allocation7 + $0x370] sm:$0xff]
        %v1381 = vld [vmem:[#allocation7 + $0x378] sm:$0xff]
        %v1382 = vld [vmem:[#allocation7 + $0x380] sm:$0xff]
        %v1383 = vld [vmem:[#allocation7 + $0x388] sm:$0xff]
        %v1384 = vld [vmem:[#allocation7 + $0x390] sm:$0xff]
        %v1385 = vld [vmem:[#allocation7 + $0x398] sm:$0xff]
        %v1386 = vld [vmem:[#allocation7 + $0x3a0] sm:$0xff]
        %v1387 = vld [vmem:[#allocation7 + $0x3a8] sm:$0xff]
        %v1388 = vld [vmem:[#allocation7 + $0x3b0] sm:$0xff]
        %v1389 = vld [vmem:[#allocation7 + $0x3b8] sm:$0xff]
        %v1390 = vld [vmem:[#allocation7 + $0x3c0] sm:$0xff]
        %v1391 = vld [vmem:[#allocation7 + $0x3c8] sm:$0xff]
        %v1392 = vld [vmem:[#allocation7 + $0x3d0] sm:$0xff]
        %v1393 = vld [vmem:[#allocation7 + $0x3d8] sm:$0xff]
        %v1394 = vld [vmem:[#allocation7 + $0x3e0] sm:$0xff]
        %v1395 = vld [vmem:[#allocation7 + $0x3e8] sm:$0xff]
        %v1396 = vld [vmem:[#allocation7 + $0x3f0] sm:$0xff]
        %v1397 = vld [vmem:[#allocation7 + $0x3f8] sm:$0xff]
        %v1398 = vld [vmem:[#allocation7 + $0x400] sm:$0xff]
        %v1399 = vld [vmem:[#allocation7 + $0x408] sm:$0xff]
        %v1400 = vld [vmem:[#allocation7 + $0x410] sm:$0xff]
        %v1401 = vld [vmem:[#allocation7 + $0x418] sm:$0xff]
        %v1402 = vld [vmem:[#allocation7 + $0x420] sm:$0xff]
        %v1403 = vld [vmem:[#allocation7 + $0x428] sm:$0xff]
        %v1404 = vld [vmem:[#allocation7 + $0x430] sm:$0xff]
        %v1405 = vld [vmem:[#allocation7 + $0x438] sm:$0xff]
        %v1406 = vld [vmem:[#allocation7 + $0x440] sm:$0xff]
        %v1407 = vld [vmem:[#allocation7 + $0x448] sm:$0xff]
        %v1408 = vld [vmem:[#allocation7 + $0x450] sm:$0xff]
        %v1409 = vld [vmem:[#allocation7 + $0x458] sm:$0xff]
        %v1410 = vld [vmem:[#allocation7 + $0x460] sm:$0xff]
        %v1411 = vld [vmem:[#allocation7 + $0x468] sm:$0xff]
        %v1412 = vld [vmem:[#allocation7 + $0x470] sm:$0xff]
        %v1413 = vld [vmem:[#allocation7 + $0x478] sm:$0xff]
        %vm1419 = vcmask 1046528
        %v1420 = vrot.slane %v343, 1
        %v1421 = vrot.slane %v344, 1
        %v1422 = vsel %vm1419, %v1420, %v1421
        %v1423 = vrot.slane %v345, 1
        %v1424 = vsel %vm1419, %v1421, %v1423
        %v1425 = vrot.slane %v346, 1
        %v1426 = vsel %vm1419, %v1423, %v1425
        %v1427 = vrot.slane %v396, 1
        %v1428 = vsel %vm1419, %v1425, %v1427
        %v1482 = vunpack.c.l.b16 %v1366
        %v1483 = vunpack.c.h.b16 %v1366
        %v1484 = vunpack.c.l.b16 %v1367
        %v1485 = vunpack.c.h.b16 %v1367
        %v1486 = vunpack.c.l.b16 %v1368
        %v1487 = vunpack.c.h.b16 %v1368
        %v1488 = vunpack.c.l.b16 %v1369
        %v1489 = vunpack.c.h.b16 %v1369
        %v1490 = vunpack.c.l.b16 %v1370
        %v1491 = vunpack.c.h.b16 %v1370
        %v1492 = vunpack.c.l.b16 %v1371
        %v1493 = vunpack.c.h.b16 %v1371
        %v1494 = vunpack.c.l.b16 %v1372
        %v1495 = vunpack.c.h.b16 %v1372
        %v1496 = vunpack.c.l.b16 %v1373
        %v1497 = vunpack.c.h.b16 %v1373
        %v1498 = vunpack.c.l.b16 %v1374
        %v1499 = vunpack.c.h.b16 %v1374
        %v1500 = vunpack.c.l.b16 %v1375
        %v1501 = vunpack.c.h.b16 %v1375
        %v1502 = vunpack.c.l.b16 %v1376
        %v1503 = vunpack.c.h.b16 %v1376
        %v1504 = vunpack.c.l.b16 %v1377
        %v1505 = vunpack.c.h.b16 %v1377
        %v1506 = vunpack.c.l.b16 %v1378
        %v1507 = vunpack.c.h.b16 %v1378
        %v1508 = vunpack.c.l.b16 %v1379
        %v1509 = vunpack.c.h.b16 %v1379
        %v1510 = vunpack.c.l.b16 %v1380
        %v1511 = vunpack.c.h.b16 %v1380
        %v1512 = vunpack.c.l.b16 %v1381
        %v1513 = vunpack.c.h.b16 %v1381
        %v1514 = vunpack.c.l.b16 %v1382
        %v1515 = vunpack.c.h.b16 %v1382
        %v1516 = vunpack.c.l.b16 %v1383
        %v1517 = vunpack.c.h.b16 %v1383
        %v1518 = vunpack.c.l.b16 %v1384
        %v1519 = vunpack.c.h.b16 %v1384
        %v1520 = vunpack.c.l.b16 %v1385
        %v1521 = vunpack.c.h.b16 %v1385
        %v1522 = vunpack.c.l.b16 %v1386
        %v1523 = vunpack.c.h.b16 %v1386
        %v1524 = vunpack.c.l.b16 %v1387
        %v1525 = vunpack.c.h.b16 %v1387
        %v1526 = vunpack.c.l.b16 %v1388
        %v1527 = vunpack.c.h.b16 %v1388
        %v1528 = vunpack.c.l.b16 %v1389
        %v1529 = vunpack.c.h.b16 %v1389
        %v1530 = vunpack.c.l.b16 %v1390
        %v1531 = vunpack.c.h.b16 %v1390
        %v1532 = vunpack.c.l.b16 %v1391
        %v1533 = vunpack.c.h.b16 %v1391
        %v1534 = vunpack.c.l.b16 %v1392
        %v1535 = vunpack.c.h.b16 %v1392
        %v1536 = vunpack.c.l.b16 %v1393
        %v1537 = vunpack.c.h.b16 %v1393
        %v1538 = vunpack.c.l.b16 %v1394
        %v1539 = vunpack.c.h.b16 %v1394
        %v1540 = vunpack.c.l.b16 %v1395
        %v1541 = vunpack.c.h.b16 %v1395
        %v1542 = vunpack.c.l.b16 %v1396
        %v1543 = vunpack.c.h.b16 %v1396
        %v1544 = vunpack.c.l.b16 %v1397
        %v1545 = vunpack.c.h.b16 %v1397
        %v1546 = vunpack.c.l.b16 %v1398
        %v1547 = vunpack.c.h.b16 %v1398
        %v1548 = vunpack.c.l.b16 %v1399
        %v1549 = vunpack.c.h.b16 %v1399
        %v1550 = vunpack.c.l.b16 %v1400
        %v1551 = vunpack.c.h.b16 %v1400
        %v1552 = vunpack.c.l.b16 %v1401
        %v1553 = vunpack.c.h.b16 %v1401
        %v1554 = vunpack.c.l.b16 %v1402
        %v1555 = vunpack.c.h.b16 %v1402
        %v1556 = vunpack.c.l.b16 %v1403
        %v1557 = vunpack.c.h.b16 %v1403
        %v1558 = vunpack.c.l.b16 %v1404
        %v1559 = vunpack.c.h.b16 %v1404
        %v1560 = vunpack.c.l.b16 %v1405
        %v1561 = vunpack.c.h.b16 %v1405
        %v1562 = vunpack.c.l.b16 %v1406
        %v1563 = vunpack.c.h.b16 %v1406
        %v1564 = vunpack.c.l.b16 %v1407
        %v1565 = vunpack.c.h.b16 %v1407
        %v1566 = vunpack.c.l.b16 %v1408
        %v1567 = vunpack.c.h.b16 %v1408
        %v1568 = vunpack.c.l.b16 %v1409
        %v1569 = vunpack.c.h.b16 %v1409
        %v1570 = vunpack.c.l.b16 %v1410
        %v1571 = vunpack.c.h.b16 %v1410
        %v1572 = vunpack.c.l.b16 %v1411
        %v1573 = vunpack.c.h.b16 %v1411
        %v1574 = vunpack.c.l.b16 %v1412
        %v1575 = vunpack.c.h.b16 %v1412
        %v1576 = vunpack.c.l.b16 %v1413
        %v1577 = vunpack.c.h.b16 %v1413
        %v1578 = vpack.c.b16 %v1488, %v1482
        %v1579 = vpack.c.b16 %v1489, %v1483
        %v1580 = vpack.c.b16 %v1490, %v1484
        %v1581 = vpack.c.b16 %v1491, %v1485
        %v1582 = vpack.c.b16 %v1492, %v1486
        %v1583 = vpack.c.b16 %v1493, %v1487
        %v1584 = vpack.c.b16 %v1500, %v1494
        %v1585 = vpack.c.b16 %v1501, %v1495
        %v1586 = vpack.c.b16 %v1502, %v1496
        %v1587 = vpack.c.b16 %v1503, %v1497
        %v1588 = vpack.c.b16 %v1504, %v1498
        %v1589 = vpack.c.b16 %v1505, %v1499
        %v1590 = vpack.c.b16 %v1512, %v1506
        %v1591 = vpack.c.b16 %v1513, %v1507
        %v1592 = vpack.c.b16 %v1514, %v1508
        %v1593 = vpack.c.b16 %v1515, %v1509
        %v1594 = vpack.c.b16 %v1516, %v1510
        %v1595 = vpack.c.b16 %v1517, %v1511
        %v1596 = vpack.c.b16 %v1524, %v1518
        %v1597 = vpack.c.b16 %v1525, %v1519
        %v1598 = vpack.c.b16 %v1526, %v1520
        %v1599 = vpack.c.b16 %v1527, %v1521
        %v1600 = vpack.c.b16 %v1528, %v1522
        %v1601 = vpack.c.b16 %v1529, %v1523
        %v1602 = vpack.c.b16 %v1536, %v1530
        %v1603 = vpack.c.b16 %v1537, %v1531
        %v1604 = vpack.c.b16 %v1538, %v1532
        %v1605 = vpack.c.b16 %v1539, %v1533
        %v1606 = vpack.c.b16 %v1540, %v1534
        %v1607 = vpack.c.b16 %v1541, %v1535
        %v1608 = vpack.c.b16 %v1548, %v1542
        %v1609 = vpack.c.b16 %v1549, %v1543
        %v1610 = vpack.c.b16 %v1550, %v1544
        %v1611 = vpack.c.b16 %v1551, %v1545
        %v1612 = vpack.c.b16 %v1552, %v1546
        %v1613 = vpack.c.b16 %v1553, %v1547
        %v1614 = vpack.c.b16 %v1560, %v1554
        %v1615 = vpack.c.b16 %v1561, %v1555
        %v1616 = vpack.c.b16 %v1562, %v1556
        %v1617 = vpack.c.b16 %v1563, %v1557
        %v1618 = vpack.c.b16 %v1564, %v1558
        %v1619 = vpack.c.b16 %v1565, %v1559
        %v1620 = vpack.c.b16 %v1572, %v1566
        %v1621 = vpack.c.b16 %v1573, %v1567
        %v1622 = vpack.c.b16 %v1574, %v1568
        %v1623 = vpack.c.b16 %v1575, %v1569
        %v1624 = vpack.c.b16 %v1576, %v1570
        %v1625 = vpack.c.b16 %v1577, %v1571
        %1674 = vmatpush.bf16.msra.mxu0 %v1620
        %1675 = vmatpush.bf16.msra.mxu0 %v1614
        %1676 = vmatpush.bf16.msra.mxu0 %v1608
        %1677 = vmatpush.bf16.msra.mxu0 %v1602
        %1678 = vmatpush.bf16.msra.mxu0 %v1596
        %1679 = vmatpush.bf16.msra.mxu0 %v1590
        %1680 = vmatpush.bf16.msra.mxu0 %v1584
        %1681 = vmatpush.bf16.msra.mxu0 %v1578
        %1682 = vmatmul.bf16.gmra.mxu0 %v1422
        %v1683 = vpop.f32.mrf.mxu0
        %v1684 = vadd.f32 0.0, %v1683
        %v1685 = vpop.f32.mrf.mxu0
        %v1686 = vadd.f32 0.0, %v1685
        %1687 = vmatmul.bf16.gmra.mxu0 %v1424
        %v1688 = vpop.f32.mrf.mxu0
        %v1689 = vadd.f32 0.0, %v1688
        %v1690 = vpop.f32.mrf.mxu0
        %v1691 = vadd.f32 0.0, %v1690
        %1692 = vmatmul.bf16.gmra.mxu0 %v1426
        %v1693 = vpop.f32.mrf.mxu0
        %v1694 = vadd.f32 0.0, %v1693
        %v1695 = vpop.f32.mrf.mxu0
        %v1696 = vadd.f32 0.0, %v1695
        %1697 = vmatmul.bf16.gmra.mxu0 %v1428
        %v1698 = vpop.f32.mrf.mxu0
        %v1699 = vadd.f32 0.0, %v1698
        %v1700 = vpop.f32.mrf.mxu0
        %v1701 = vadd.f32 0.0, %v1700
        %1702 = vmatmul.bf16.gmra.mxu0 %v1427
        %v1703 = vpop.f32.mrf.mxu0
        %v1704 = vadd.f32 0.0, %v1703
        %v1705 = vpop.f32.mrf.mxu0
        %1706 = vdwg.mxu0
        %1707 = vmatpush.bf16.msra.mxu0 %v1621
        %1708 = vmatpush.bf16.msra.mxu0 %v1615
        %1709 = vmatpush.bf16.msra.mxu0 %v1609
        %1710 = vmatpush.bf16.msra.mxu0 %v1603
        %1711 = vmatpush.bf16.msra.mxu0 %v1597
        %1712 = vmatpush.bf16.msra.mxu0 %v1591
        %1713 = vmatpush.bf16.msra.mxu0 %v1585
        %1714 = vmatpush.bf16.msra.mxu0 %v1579
        %1715 = vmatmul.bf16.gmra.mxu0 %v1422
        %v1716 = vpop.f32.mrf.mxu0
        %v1717 = vadd.f32 0.0, %v1716
        %v1718 = vpop.f32.mrf.mxu0
        %v1719 = vadd.f32 0.0, %v1718
        %1720 = vmatmul.bf16.gmra.mxu0 %v1424
        %v1721 = vpop.f32.mrf.mxu0
        %v1722 = vadd.f32 0.0, %v1721
        %v1723 = vpop.f32.mrf.mxu0
        %v1724 = vadd.f32 0.0, %v1723
        %1725 = vmatmul.bf16.gmra.mxu0 %v1426
        %v1726 = vpop.f32.mrf.mxu0
        %v1727 = vadd.f32 0.0, %v1726
        %v1728 = vpop.f32.mrf.mxu0
        %v1729 = vadd.f32 0.0, %v1728
        %1730 = vmatmul.bf16.gmra.mxu0 %v1428
        %v1731 = vpop.f32.mrf.mxu0
        %v1732 = vadd.f32 0.0, %v1731
        %v1733 = vpop.f32.mrf.mxu0
        %v1734 = vadd.f32 0.0, %v1733
        %1735 = vmatmul.bf16.gmra.mxu0 %v1427
        %v1736 = vpop.f32.mrf.mxu0
        %v1737 = vadd.f32 0.0, %v1736
        %v1738 = vpop.f32.mrf.mxu0
        %1739 = vdwg.mxu0
        %1740 = vmatpush.bf16.msra.mxu0 %v1622
        %1741 = vmatpush.bf16.msra.mxu0 %v1616
        %1742 = vmatpush.bf16.msra.mxu0 %v1610
        %1743 = vmatpush.bf16.msra.mxu0 %v1604
        %1744 = vmatpush.bf16.msra.mxu0 %v1598
        %1745 = vmatpush.bf16.msra.mxu0 %v1592
        %1746 = vmatpush.bf16.msra.mxu0 %v1586
        %1747 = vmatpush.bf16.msra.mxu0 %v1580
        %1748 = vmatmul.bf16.gmra.mxu0 %v1422
        %v1749 = vpop.f32.mrf.mxu0
        %v1750 = vadd.f32 0.0, %v1749
        %v1751 = vpop.f32.mrf.mxu0
        %v1752 = vadd.f32 0.0, %v1751
        %1753 = vmatmul.bf16.gmra.mxu0 %v1424
        %v1754 = vpop.f32.mrf.mxu0
        %v1755 = vadd.f32 0.0, %v1754
        %v1756 = vpop.f32.mrf.mxu0
        %v1757 = vadd.f32 0.0, %v1756
        %1758 = vmatmul.bf16.gmra.mxu0 %v1426
        %v1759 = vpop.f32.mrf.mxu0
        %v1760 = vadd.f32 0.0, %v1759
        %v1761 = vpop.f32.mrf.mxu0
        %v1762 = vadd.f32 0.0, %v1761
        %1763 = vmatmul.bf16.gmra.mxu0 %v1428
        %v1764 = vpop.f32.mrf.mxu0
        %v1765 = vadd.f32 0.0, %v1764
        %v1766 = vpop.f32.mrf.mxu0
        %v1767 = vadd.f32 0.0, %v1766
        %1768 = vmatmul.bf16.gmra.mxu0 %v1427
        %v1769 = vpop.f32.mrf.mxu0
        %v1770 = vadd.f32 0.0, %v1769
        %v1771 = vpop.f32.mrf.mxu0
        %1772 = vdwg.mxu0
        %1773 = vmatpush.bf16.msra.mxu0 %v1623
        %1774 = vmatpush.bf16.msra.mxu0 %v1617
        %1775 = vmatpush.bf16.msra.mxu0 %v1611
        %1776 = vmatpush.bf16.msra.mxu0 %v1605
        %1777 = vmatpush.bf16.msra.mxu0 %v1599
        %1778 = vmatpush.bf16.msra.mxu0 %v1593
        %1779 = vmatpush.bf16.msra.mxu0 %v1587
        %1780 = vmatpush.bf16.msra.mxu0 %v1581
        %1781 = vmatmul.bf16.gmra.mxu0 %v1422
        %v1782 = vpop.f32.mrf.mxu0
        %v1783 = vadd.f32 0.0, %v1782
        %v1784 = vpop.f32.mrf.mxu0
        %v1785 = vadd.f32 0.0, %v1784
        %1786 = vmatmul.bf16.gmra.mxu0 %v1424
        %v1787 = vpop.f32.mrf.mxu0
        %v1788 = vadd.f32 0.0, %v1787
        %v1789 = vpop.f32.mrf.mxu0
        %v1790 = vadd.f32 0.0, %v1789
        %1791 = vmatmul.bf16.gmra.mxu0 %v1426
        %v1792 = vpop.f32.mrf.mxu0
        %v1793 = vadd.f32 0.0, %v1792
        %v1794 = vpop.f32.mrf.mxu0
        %v1795 = vadd.f32 0.0, %v1794
        %1796 = vmatmul.bf16.gmra.mxu0 %v1428
        %v1797 = vpop.f32.mrf.mxu0
        %v1798 = vadd.f32 0.0, %v1797
        %v1799 = vpop.f32.mrf.mxu0
        %v1800 = vadd.f32 0.0, %v1799
        %1801 = vmatmul.bf16.gmra.mxu0 %v1427
        %v1802 = vpop.f32.mrf.mxu0
        %v1803 = vadd.f32 0.0, %v1802
        %v1804 = vpop.f32.mrf.mxu0
        %1805 = vdwg.mxu0
        %1806 = vmatpush.bf16.msra.mxu0 %v1624
        %1807 = vmatpush.bf16.msra.mxu0 %v1618
        %1808 = vmatpush.bf16.msra.mxu0 %v1612
        %1809 = vmatpush.bf16.msra.mxu0 %v1606
        %1810 = vmatpush.bf16.msra.mxu0 %v1600
        %1811 = vmatpush.bf16.msra.mxu0 %v1594
        %1812 = vmatpush.bf16.msra.mxu0 %v1588
        %1813 = vmatpush.bf16.msra.mxu0 %v1582
        %1814 = vmatmul.bf16.gmra.mxu0 %v1422
        %v1815 = vpop.f32.mrf.mxu0
        %v1816 = vadd.f32 0.0, %v1815
        %v1817 = vpop.f32.mrf.mxu0
        %v1818 = vadd.f32 0.0, %v1817
        %1819 = vmatmul.bf16.gmra.mxu0 %v1424
        %v1820 = vpop.f32.mrf.mxu0
        %v1821 = vadd.f32 0.0, %v1820
        %v1822 = vpop.f32.mrf.mxu0
        %v1823 = vadd.f32 0.0, %v1822
        %1824 = vmatmul.bf16.gmra.mxu0 %v1426
        %v1825 = vpop.f32.mrf.mxu0
        %v1826 = vadd.f32 0.0, %v1825
        %v1827 = vpop.f32.mrf.mxu0
        %v1828 = vadd.f32 0.0, %v1827
        %1829 = vmatmul.bf16.gmra.mxu0 %v1428
        %v1830 = vpop.f32.mrf.mxu0
        %v1831 = vadd.f32 0.0, %v1830
        %v1832 = vpop.f32.mrf.mxu0
        %v1833 = vadd.f32 0.0, %v1832
        %1834 = vmatmul.bf16.gmra.mxu0 %v1427
        %v1835 = vpop.f32.mrf.mxu0
        %v1836 = vadd.f32 0.0, %v1835
        %v1837 = vpop.f32.mrf.mxu0
        %1838 = vdwg.mxu0
        %1839 = vmatpush.bf16.msra.mxu0 %v1625
        %1840 = vmatpush.bf16.msra.mxu0 %v1619
        %1841 = vmatpush.bf16.msra.mxu0 %v1613
        %1842 = vmatpush.bf16.msra.mxu0 %v1607
        %1843 = vmatpush.bf16.msra.mxu0 %v1601
        %1844 = vmatpush.bf16.msra.mxu0 %v1595
        %1845 = vmatpush.bf16.msra.mxu0 %v1589
        %1846 = vmatpush.bf16.msra.mxu0 %v1583
        %1847 = vmatmul.bf16.gmra.mxu0 %v1422
        %v1848 = vpop.f32.mrf.mxu0
        %v1849 = vadd.f32 0.0, %v1848
        %v1850 = vpop.f32.mrf.mxu0
        %v1851 = vadd.f32 0.0, %v1850
        %1852 = vmatmul.bf16.gmra.mxu0 %v1424
        %v1853 = vpop.f32.mrf.mxu0
        %v1854 = vadd.f32 0.0, %v1853
        %v1855 = vpop.f32.mrf.mxu0
        %v1856 = vadd.f32 0.0, %v1855
        %1857 = vmatmul.bf16.gmra.mxu0 %v1426
        %v1858 = vpop.f32.mrf.mxu0
        %v1859 = vadd.f32 0.0, %v1858
        %v1860 = vpop.f32.mrf.mxu0
        %v1861 = vadd.f32 0.0, %v1860
        %1862 = vmatmul.bf16.gmra.mxu0 %v1428
        %v1863 = vpop.f32.mrf.mxu0
        %v1864 = vadd.f32 0.0, %v1863
        %v1865 = vpop.f32.mrf.mxu0
        %v1866 = vadd.f32 0.0, %v1865
        %1867 = vmatmul.bf16.gmra.mxu0 %v1427
        %v1868 = vpop.f32.mrf.mxu0
        %v1869 = vadd.f32 0.0, %v1868
        %v1870 = vpop.f32.mrf.mxu0
        %1871 = vdwg.mxu0
        %v1872 = vadd.f32 %v1178, %v1684
        %v1873 = vadd.f32 %v1211, %v1717
        %v1874 = vadd.f32 %v1244, %v1750
        %v1875 = vadd.f32 %v1277, %v1783
        %v1876 = vadd.f32 %v1310, %v1816
        %v1877 = vadd.f32 %v1343, %v1849
        %v1878 = vadd.f32 %v1180, %v1686
        %v1879 = vadd.f32 %v1213, %v1719
        %v1880 = vadd.f32 %v1246, %v1752
        %v1881 = vadd.f32 %v1279, %v1785
        %v1882 = vadd.f32 %v1312, %v1818
        %v1883 = vadd.f32 %v1345, %v1851
        %v1884 = vadd.f32 %v1183, %v1689
        %v1885 = vadd.f32 %v1216, %v1722
        %v1886 = vadd.f32 %v1249, %v1755
        %v1887 = vadd.f32 %v1282, %v1788
        %v1888 = vadd.f32 %v1315, %v1821
        %v1889 = vadd.f32 %v1348, %v1854
        %v1890 = vadd.f32 %v1185, %v1691
        %v1891 = vadd.f32 %v1218, %v1724
        %v1892 = vadd.f32 %v1251, %v1757
        %v1893 = vadd.f32 %v1284, %v1790
        %v1894 = vadd.f32 %v1317, %v1823
        %v1895 = vadd.f32 %v1350, %v1856
        %v1896 = vadd.f32 %v1188, %v1694
        %v1897 = vadd.f32 %v1221, %v1727
        %v1898 = vadd.f32 %v1254, %v1760
        %v1899 = vadd.f32 %v1287, %v1793
        %v1900 = vadd.f32 %v1320, %v1826
        %v1901 = vadd.f32 %v1353, %v1859
        %v1902 = vadd.f32 %v1190, %v1696
        %v1903 = vadd.f32 %v1223, %v1729
        %v1904 = vadd.f32 %v1256, %v1762
        %v1905 = vadd.f32 %v1289, %v1795
        %v1906 = vadd.f32 %v1322, %v1828
        %v1907 = vadd.f32 %v1355, %v1861
        %v1908 = vadd.f32 %v1193, %v1699
        %v1909 = vadd.f32 %v1226, %v1732
        %v1910 = vadd.f32 %v1259, %v1765
        %v1911 = vadd.f32 %v1292, %v1798
        %v1912 = vadd.f32 %v1325, %v1831
        %v1913 = vadd.f32 %v1358, %v1864
        %v1914 = vadd.f32 %v1195, %v1701
        %v1915 = vadd.f32 %v1228, %v1734
        %v1916 = vadd.f32 %v1261, %v1767
        %v1917 = vadd.f32 %v1294, %v1800
        %v1918 = vadd.f32 %v1327, %v1833
        %v1919 = vadd.f32 %v1360, %v1866
        %v1920 = vadd.f32 %v1198, %v1704
        %v1921 = vadd.f32 %v1231, %v1737
        %v1922 = vadd.f32 %v1264, %v1770
        %v1923 = vadd.f32 %v1297, %v1803
        %v1924 = vadd.f32 %v1330, %v1836
        %v1925 = vadd.f32 %v1363, %v1869
        %v1926 = vld [vmem:[#allocation7 + $0x480] sm:$0xff]
        %v1927 = vld [vmem:[#allocation7 + $0x488] sm:$0xff]
        %v1928 = vld [vmem:[#allocation7 + $0x490] sm:$0xff]
        %v1929 = vld [vmem:[#allocation7 + $0x498] sm:$0xff]
        %v1930 = vld [vmem:[#allocation7 + $0x4a0] sm:$0xff]
        %v1931 = vld [vmem:[#allocation7 + $0x4a8] sm:$0xff]
        %v1932 = vld [vmem:[#allocation7 + $0x4b0] sm:$0xff]
        %v1933 = vld [vmem:[#allocation7 + $0x4b8] sm:$0xff]
        %v1934 = vld [vmem:[#allocation7 + $0x4c0] sm:$0xff]
        %v1935 = vld [vmem:[#allocation7 + $0x4c8] sm:$0xff]
        %v1936 = vld [vmem:[#allocation7 + $0x4d0] sm:$0xff]
        %v1937 = vld [vmem:[#allocation7 + $0x4d8] sm:$0xff]
        %v1938 = vld [vmem:[#allocation7 + $0x4e0] sm:$0xff]
        %v1939 = vld [vmem:[#allocation7 + $0x4e8] sm:$0xff]
        %v1940 = vld [vmem:[#allocation7 + $0x4f0] sm:$0xff]
        %v1941 = vld [vmem:[#allocation7 + $0x4f8] sm:$0xff]
        %v1942 = vld [vmem:[#allocation7 + $0x500] sm:$0xff]
        %v1943 = vld [vmem:[#allocation7 + $0x508] sm:$0xff]
        %v1944 = vld [vmem:[#allocation7 + $0x510] sm:$0xff]
        %v1945 = vld [vmem:[#allocation7 + $0x518] sm:$0xff]
        %v1946 = vld [vmem:[#allocation7 + $0x520] sm:$0xff]
        %v1947 = vld [vmem:[#allocation7 + $0x528] sm:$0xff]
        %v1948 = vld [vmem:[#allocation7 + $0x530] sm:$0xff]
        %v1949 = vld [vmem:[#allocation7 + $0x538] sm:$0xff]
        %v1950 = vld [vmem:[#allocation7 + $0x540] sm:$0xff]
        %v1951 = vld [vmem:[#allocation7 + $0x548] sm:$0xff]
        %v1952 = vld [vmem:[#allocation7 + $0x550] sm:$0xff]
        %v1953 = vld [vmem:[#allocation7 + $0x558] sm:$0xff]
        %v1954 = vld [vmem:[#allocation7 + $0x560] sm:$0xff]
        %v1955 = vld [vmem:[#allocation7 + $0x568] sm:$0xff]
        %v1956 = vld [vmem:[#allocation7 + $0x570] sm:$0xff]
        %v1957 = vld [vmem:[#allocation7 + $0x578] sm:$0xff]
        %v1958 = vld [vmem:[#allocation7 + $0x580] sm:$0xff]
        %v1959 = vld [vmem:[#allocation7 + $0x588] sm:$0xff]
        %v1960 = vld [vmem:[#allocation7 + $0x590] sm:$0xff]
        %v1961 = vld [vmem:[#allocation7 + $0x598] sm:$0xff]
        %v1962 = vld [vmem:[#allocation7 + $0x5a0] sm:$0xff]
        %v1963 = vld [vmem:[#allocation7 + $0x5a8] sm:$0xff]
        %v1964 = vld [vmem:[#allocation7 + $0x5b0] sm:$0xff]
        %v1965 = vld [vmem:[#allocation7 + $0x5b8] sm:$0xff]
        %v1966 = vld [vmem:[#allocation7 + $0x5c0] sm:$0xff]
        %v1967 = vld [vmem:[#allocation7 + $0x5c8] sm:$0xff]
        %v1968 = vld [vmem:[#allocation7 + $0x5d0] sm:$0xff]
        %v1969 = vld [vmem:[#allocation7 + $0x5d8] sm:$0xff]
        %v1970 = vld [vmem:[#allocation7 + $0x5e0] sm:$0xff]
        %v1971 = vld [vmem:[#allocation7 + $0x5e8] sm:$0xff]
        %v1972 = vld [vmem:[#allocation7 + $0x5f0] sm:$0xff]
        %v1973 = vld [vmem:[#allocation7 + $0x5f8] sm:$0xff]
        %vm1974 = vsmask.f32 6400
        %v1975 = vrot.slane %v447, 1
        %v1976 = vrot.slane %v449, 2
        %v1977 = vor.u32 %v1975, %v1976
        %v1978 = vrot.slane %v458, 1
        %v1979 = vrot.slane %v454, 2
        %v1980 = vor.u32 %v1978, %v1979
        %v1981 = vsel %vm1974, %v1977, %v1980
        %v1982 = vrot.slane %v466, 1
        %v1983 = vrot.slane %v462, 2
        %v1984 = vor.u32 %v1982, %v1983
        %v1985 = vsel %vm1974, %v1980, %v1984
        %v1986 = vrot.slane %v474, 1
        %v1987 = vrot.slane %v470, 2
        %v1988 = vor.u32 %v1986, %v1987
        %v1989 = vsel %vm1974, %v1984, %v1988
        %v1990 = vrot.slane %v482, 1
        %v1991 = vrot.slane %v478, 2
        %v1992 = vor.u32 %v1990, %v1991
        %v1993 = vsel %vm1974, %v1988, %v1992
        %v2047 = vunpack.c.l.b16 %v1926
        %v2048 = vunpack.c.h.b16 %v1926
        %v2049 = vunpack.c.l.b16 %v1927
        %v2050 = vunpack.c.h.b16 %v1927
        %v2051 = vunpack.c.l.b16 %v1928
        %v2052 = vunpack.c.h.b16 %v1928
        %v2053 = vunpack.c.l.b16 %v1929
        %v2054 = vunpack.c.h.b16 %v1929
        %v2055 = vunpack.c.l.b16 %v1930
        %v2056 = vunpack.c.h.b16 %v1930
        %v2057 = vunpack.c.l.b16 %v1931
        %v2058 = vunpack.c.h.b16 %v1931
        %v2059 = vunpack.c.l.b16 %v1932
        %v2060 = vunpack.c.h.b16 %v1932
        %v2061 = vunpack.c.l.b16 %v1933
        %v2062 = vunpack.c.h.b16 %v1933
        %v2063 = vunpack.c.l.b16 %v1934
        %v2064 = vunpack.c.h.b16 %v1934
        %v2065 = vunpack.c.l.b16 %v1935
        %v2066 = vunpack.c.h.b16 %v1935
        %v2067 = vunpack.c.l.b16 %v1936
        %v2068 = vunpack.c.h.b16 %v1936
        %v2069 = vunpack.c.l.b16 %v1937
        %v2070 = vunpack.c.h.b16 %v1937
        %v2071 = vunpack.c.l.b16 %v1938
        %v2072 = vunpack.c.h.b16 %v1938
        %v2073 = vunpack.c.l.b16 %v1939
        %v2074 = vunpack.c.h.b16 %v1939
        %v2075 = vunpack.c.l.b16 %v1940
        %v2076 = vunpack.c.h.b16 %v1940
        %v2077 = vunpack.c.l.b16 %v1941
        %v2078 = vunpack.c.h.b16 %v1941
        %v2079 = vunpack.c.l.b16 %v1942
        %v2080 = vunpack.c.h.b16 %v1942
        %v2081 = vunpack.c.l.b16 %v1943
        %v2082 = vunpack.c.h.b16 %v1943
        %v2083 = vunpack.c.l.b16 %v1944
        %v2084 = vunpack.c.h.b16 %v1944
        %v2085 = vunpack.c.l.b16 %v1945
        %v2086 = vunpack.c.h.b16 %v1945
        %v2087 = vunpack.c.l.b16 %v1946
        %v2088 = vunpack.c.h.b16 %v1946
        %v2089 = vunpack.c.l.b16 %v1947
        %v2090 = vunpack.c.h.b16 %v1947
        %v2091 = vunpack.c.l.b16 %v1948
        %v2092 = vunpack.c.h.b16 %v1948
        %v2093 = vunpack.c.l.b16 %v1949
        %v2094 = vunpack.c.h.b16 %v1949
        %v2095 = vunpack.c.l.b16 %v1950
        %v2096 = vunpack.c.h.b16 %v1950
        %v2097 = vunpack.c.l.b16 %v1951
        %v2098 = vunpack.c.h.b16 %v1951
        %v2099 = vunpack.c.l.b16 %v1952
        %v2100 = vunpack.c.h.b16 %v1952
        %v2101 = vunpack.c.l.b16 %v1953
        %v2102 = vunpack.c.h.b16 %v1953
        %v2103 = vunpack.c.l.b16 %v1954
        %v2104 = vunpack.c.h.b16 %v1954
        %v2105 = vunpack.c.l.b16 %v1955
        %v2106 = vunpack.c.h.b16 %v1955
        %v2107 = vunpack.c.l.b16 %v1956
        %v2108 = vunpack.c.h.b16 %v1956
        %v2109 = vunpack.c.l.b16 %v1957
        %v2110 = vunpack.c.h.b16 %v1957
        %v2111 = vunpack.c.l.b16 %v1958
        %v2112 = vunpack.c.h.b16 %v1958
        %v2113 = vunpack.c.l.b16 %v1959
        %v2114 = vunpack.c.h.b16 %v1959
        %v2115 = vunpack.c.l.b16 %v1960
        %v2116 = vunpack.c.h.b16 %v1960
        %v2117 = vunpack.c.l.b16 %v1961
        %v2118 = vunpack.c.h.b16 %v1961
        %v2119 = vunpack.c.l.b16 %v1962
        %v2120 = vunpack.c.h.b16 %v1962
        %v2121 = vunpack.c.l.b16 %v1963
        %v2122 = vunpack.c.h.b16 %v1963
        %v2123 = vunpack.c.l.b16 %v1964
        %v2124 = vunpack.c.h.b16 %v1964
        %v2125 = vunpack.c.l.b16 %v1965
        %v2126 = vunpack.c.h.b16 %v1965
        %v2127 = vunpack.c.l.b16 %v1966
        %v2128 = vunpack.c.h.b16 %v1966
        %v2129 = vunpack.c.l.b16 %v1967
        %v2130 = vunpack.c.h.b16 %v1967
        %v2131 = vunpack.c.l.b16 %v1968
        %v2132 = vunpack.c.h.b16 %v1968
        %v2133 = vunpack.c.l.b16 %v1969
        %v2134 = vunpack.c.h.b16 %v1969
        %v2135 = vunpack.c.l.b16 %v1970
        %v2136 = vunpack.c.h.b16 %v1970
        %v2137 = vunpack.c.l.b16 %v1971
        %v2138 = vunpack.c.h.b16 %v1971
        %v2139 = vunpack.c.l.b16 %v1972
        %v2140 = vunpack.c.h.b16 %v1972
        %v2141 = vunpack.c.l.b16 %v1973
        %v2142 = vunpack.c.h.b16 %v1973
        %v2143 = vpack.c.b16 %v2053, %v2047
        %v2144 = vpack.c.b16 %v2054, %v2048
        %v2145 = vpack.c.b16 %v2055, %v2049
        %v2146 = vpack.c.b16 %v2056, %v2050
        %v2147 = vpack.c.b16 %v2057, %v2051
        %v2148 = vpack.c.b16 %v2058, %v2052
        %v2149 = vpack.c.b16 %v2065, %v2059
        %v2150 = vpack.c.b16 %v2066, %v2060
        %v2151 = vpack.c.b16 %v2067, %v2061
        %v2152 = vpack.c.b16 %v2068, %v2062
        %v2153 = vpack.c.b16 %v2069, %v2063
        %v2154 = vpack.c.b16 %v2070, %v2064
        %v2155 = vpack.c.b16 %v2077, %v2071
        %v2156 = vpack.c.b16 %v2078, %v2072
        %v2157 = vpack.c.b16 %v2079, %v2073
        %v2158 = vpack.c.b16 %v2080, %v2074
        %v2159 = vpack.c.b16 %v2081, %v2075
        %v2160 = vpack.c.b16 %v2082, %v2076
        %v2161 = vpack.c.b16 %v2089, %v2083
        %v2162 = vpack.c.b16 %v2090, %v2084
        %v2163 = vpack.c.b16 %v2091, %v2085
        %v2164 = vpack.c.b16 %v2092, %v2086
        %v2165 = vpack.c.b16 %v2093, %v2087
        %v2166 = vpack.c.b16 %v2094, %v2088
        %v2167 = vpack.c.b16 %v2101, %v2095
        %v2168 = vpack.c.b16 %v2102, %v2096
        %v2169 = vpack.c.b16 %v2103, %v2097
        %v2170 = vpack.c.b16 %v2104, %v2098
        %v2171 = vpack.c.b16 %v2105, %v2099
        %v2172 = vpack.c.b16 %v2106, %v2100
        %v2173 = vpack.c.b16 %v2113, %v2107
        %v2174 = vpack.c.b16 %v2114, %v2108
        %v2175 = vpack.c.b16 %v2115, %v2109
        %v2176 = vpack.c.b16 %v2116, %v2110
        %v2177 = vpack.c.b16 %v2117, %v2111
        %v2178 = vpack.c.b16 %v2118, %v2112
        %v2179 = vpack.c.b16 %v2125, %v2119
        %v2180 = vpack.c.b16 %v2126, %v2120
        %v2181 = vpack.c.b16 %v2127, %v2121
        %v2182 = vpack.c.b16 %v2128, %v2122
        %v2183 = vpack.c.b16 %v2129, %v2123
        %v2184 = vpack.c.b16 %v2130, %v2124
        %v2185 = vpack.c.b16 %v2137, %v2131
        %v2186 = vpack.c.b16 %v2138, %v2132
        %v2187 = vpack.c.b16 %v2139, %v2133
        %v2188 = vpack.c.b16 %v2140, %v2134
        %v2189 = vpack.c.b16 %v2141, %v2135
        %v2190 = vpack.c.b16 %v2142, %v2136
        %2239 = vmatpush.bf16.msra.mxu0 %v2185
        %2240 = vmatpush.bf16.msra.mxu0 %v2179
        %2241 = vmatpush.bf16.msra.mxu0 %v2173
        %2242 = vmatpush.bf16.msra.mxu0 %v2167
        %2243 = vmatpush.bf16.msra.mxu0 %v2161
        %2244 = vmatpush.bf16.msra.mxu0 %v2155
        %2245 = vmatpush.bf16.msra.mxu0 %v2149
        %2246 = vmatpush.bf16.msra.mxu0 %v2143
        %2247 = vmatmul.bf16.gmra.mxu0 %v1981
        %v2248 = vpop.f32.mrf.mxu0
        %v2249 = vadd.f32 0.0, %v2248
        %v2250 = vpop.f32.mrf.mxu0
        %v2251 = vadd.f32 0.0, %v2250
        %2252 = vmatmul.bf16.gmra.mxu0 %v1985
        %v2253 = vpop.f32.mrf.mxu0
        %v2254 = vadd.f32 0.0, %v2253
        %v2255 = vpop.f32.mrf.mxu0
        %v2256 = vadd.f32 0.0, %v2255
        %2257 = vmatmul.bf16.gmra.mxu0 %v1989
        %v2258 = vpop.f32.mrf.mxu0
        %v2259 = vadd.f32 0.0, %v2258
        %v2260 = vpop.f32.mrf.mxu0
        %v2261 = vadd.f32 0.0, %v2260
        %2262 = vmatmul.bf16.gmra.mxu0 %v1993
        %v2263 = vpop.f32.mrf.mxu0
        %v2264 = vadd.f32 0.0, %v2263
        %v2265 = vpop.f32.mrf.mxu0
        %v2266 = vadd.f32 0.0, %v2265
        %2267 = vmatmul.bf16.gmra.mxu0 %v1992
        %v2268 = vpop.f32.mrf.mxu0
        %v2269 = vadd.f32 0.0, %v2268
        %v2270 = vpop.f32.mrf.mxu0
        %2271 = vdwg.mxu0
        %2272 = vmatpush.bf16.msra.mxu0 %v2186
        %2273 = vmatpush.bf16.msra.mxu0 %v2180
        %2274 = vmatpush.bf16.msra.mxu0 %v2174
        %2275 = vmatpush.bf16.msra.mxu0 %v2168
        %2276 = vmatpush.bf16.msra.mxu0 %v2162
        %2277 = vmatpush.bf16.msra.mxu0 %v2156
        %2278 = vmatpush.bf16.msra.mxu0 %v2150
        %2279 = vmatpush.bf16.msra.mxu0 %v2144
        %2280 = vmatmul.bf16.gmra.mxu0 %v1981
        %v2281 = vpop.f32.mrf.mxu0
        %v2282 = vadd.f32 0.0, %v2281
        %v2283 = vpop.f32.mrf.mxu0
        %v2284 = vadd.f32 0.0, %v2283
        %2285 = vmatmul.bf16.gmra.mxu0 %v1985
        %v2286 = vpop.f32.mrf.mxu0
        %v2287 = vadd.f32 0.0, %v2286
        %v2288 = vpop.f32.mrf.mxu0
        %v2289 = vadd.f32 0.0, %v2288
        %2290 = vmatmul.bf16.gmra.mxu0 %v1989
        %v2291 = vpop.f32.mrf.mxu0
        %v2292 = vadd.f32 0.0, %v2291
        %v2293 = vpop.f32.mrf.mxu0
        %v2294 = vadd.f32 0.0, %v2293
        %2295 = vmatmul.bf16.gmra.mxu0 %v1993
        %v2296 = vpop.f32.mrf.mxu0
        %v2297 = vadd.f32 0.0, %v2296
        %v2298 = vpop.f32.mrf.mxu0
        %v2299 = vadd.f32 0.0, %v2298
        %2300 = vmatmul.bf16.gmra.mxu0 %v1992
        %v2301 = vpop.f32.mrf.mxu0
        %v2302 = vadd.f32 0.0, %v2301
        %v2303 = vpop.f32.mrf.mxu0
        %2304 = vdwg.mxu0
        %2305 = vmatpush.bf16.msra.mxu0 %v2187
        %2306 = vmatpush.bf16.msra.mxu0 %v2181
        %2307 = vmatpush.bf16.msra.mxu0 %v2175
        %2308 = vmatpush.bf16.msra.mxu0 %v2169
        %2309 = vmatpush.bf16.msra.mxu0 %v2163
        %2310 = vmatpush.bf16.msra.mxu0 %v2157
        %2311 = vmatpush.bf16.msra.mxu0 %v2151
        %2312 = vmatpush.bf16.msra.mxu0 %v2145
        %2313 = vmatmul.bf16.gmra.mxu0 %v1981
        %v2314 = vpop.f32.mrf.mxu0
        %v2315 = vadd.f32 0.0, %v2314
        %v2316 = vpop.f32.mrf.mxu0
        %v2317 = vadd.f32 0.0, %v2316
        %2318 = vmatmul.bf16.gmra.mxu0 %v1985
        %v2319 = vpop.f32.mrf.mxu0
        %v2320 = vadd.f32 0.0, %v2319
        %v2321 = vpop.f32.mrf.mxu0
        %v2322 = vadd.f32 0.0, %v2321
        %2323 = vmatmul.bf16.gmra.mxu0 %v1989
        %v2324 = vpop.f32.mrf.mxu0
        %v2325 = vadd.f32 0.0, %v2324
        %v2326 = vpop.f32.mrf.mxu0
        %v2327 = vadd.f32 0.0, %v2326
        %2328 = vmatmul.bf16.gmra.mxu0 %v1993
        %v2329 = vpop.f32.mrf.mxu0
        %v2330 = vadd.f32 0.0, %v2329
        %v2331 = vpop.f32.mrf.mxu0
        %v2332 = vadd.f32 0.0, %v2331
        %2333 = vmatmul.bf16.gmra.mxu0 %v1992
        %v2334 = vpop.f32.mrf.mxu0
        %v2335 = vadd.f32 0.0, %v2334
        %v2336 = vpop.f32.mrf.mxu0
        %2337 = vdwg.mxu0
        %2338 = vmatpush.bf16.msra.mxu0 %v2188
        %2339 = vmatpush.bf16.msra.mxu0 %v2182
        %2340 = vmatpush.bf16.msra.mxu0 %v2176
        %2341 = vmatpush.bf16.msra.mxu0 %v2170
        %2342 = vmatpush.bf16.msra.mxu0 %v2164
        %2343 = vmatpush.bf16.msra.mxu0 %v2158
        %2344 = vmatpush.bf16.msra.mxu0 %v2152
        %2345 = vmatpush.bf16.msra.mxu0 %v2146
        %2346 = vmatmul.bf16.gmra.mxu0 %v1981
        %v2347 = vpop.f32.mrf.mxu0
        %v2348 = vadd.f32 0.0, %v2347
        %v2349 = vpop.f32.mrf.mxu0
        %v2350 = vadd.f32 0.0, %v2349
        %2351 = vmatmul.bf16.gmra.mxu0 %v1985
        %v2352 = vpop.f32.mrf.mxu0
        %v2353 = vadd.f32 0.0, %v2352
        %v2354 = vpop.f32.mrf.mxu0
        %v2355 = vadd.f32 0.0, %v2354
        %2356 = vmatmul.bf16.gmra.mxu0 %v1989
        %v2357 = vpop.f32.mrf.mxu0
        %v2358 = vadd.f32 0.0, %v2357
        %v2359 = vpop.f32.mrf.mxu0
        %v2360 = vadd.f32 0.0, %v2359
        %2361 = vmatmul.bf16.gmra.mxu0 %v1993
        %v2362 = vpop.f32.mrf.mxu0
        %v2363 = vadd.f32 0.0, %v2362
        %v2364 = vpop.f32.mrf.mxu0
        %v2365 = vadd.f32 0.0, %v2364
        %2366 = vmatmul.bf16.gmra.mxu0 %v1992
        %v2367 = vpop.f32.mrf.mxu0
        %v2368 = vadd.f32 0.0, %v2367
        %v2369 = vpop.f32.mrf.mxu0
        %2370 = vdwg.mxu0
        %2371 = vmatpush.bf16.msra.mxu0 %v2189
        %2372 = vmatpush.bf16.msra.mxu0 %v2183
        %2373 = vmatpush.bf16.msra.mxu0 %v2177
        %2374 = vmatpush.bf16.msra.mxu0 %v2171
        %2375 = vmatpush.bf16.msra.mxu0 %v2165
        %2376 = vmatpush.bf16.msra.mxu0 %v2159
        %2377 = vmatpush.bf16.msra.mxu0 %v2153
        %2378 = vmatpush.bf16.msra.mxu0 %v2147
        %2379 = vmatmul.bf16.gmra.mxu0 %v1981
        %v2380 = vpop.f32.mrf.mxu0
        %v2381 = vadd.f32 0.0, %v2380
        %v2382 = vpop.f32.mrf.mxu0
        %v2383 = vadd.f32 0.0, %v2382
        %2384 = vmatmul.bf16.gmra.mxu0 %v1985
        %v2385 = vpop.f32.mrf.mxu0
        %v2386 = vadd.f32 0.0, %v2385
        %v2387 = vpop.f32.mrf.mxu0
        %v2388 = vadd.f32 0.0, %v2387
        %2389 = vmatmul.bf16.gmra.mxu0 %v1989
        %v2390 = vpop.f32.mrf.mxu0
        %v2391 = vadd.f32 0.0, %v2390
        %v2392 = vpop.f32.mrf.mxu0
        %v2393 = vadd.f32 0.0, %v2392
        %2394 = vmatmul.bf16.gmra.mxu0 %v1993
        %v2395 = vpop.f32.mrf.mxu0
        %v2396 = vadd.f32 0.0, %v2395
        %v2397 = vpop.f32.mrf.mxu0
        %v2398 = vadd.f32 0.0, %v2397
        %2399 = vmatmul.bf16.gmra.mxu0 %v1992
        %v2400 = vpop.f32.mrf.mxu0
        %v2401 = vadd.f32 0.0, %v2400
        %v2402 = vpop.f32.mrf.mxu0
        %2403 = vdwg.mxu0
        %2404 = vmatpush.bf16.msra.mxu0 %v2190
        %2405 = vmatpush.bf16.msra.mxu0 %v2184
        %2406 = vmatpush.bf16.msra.mxu0 %v2178
        %2407 = vmatpush.bf16.msra.mxu0 %v2172
        %2408 = vmatpush.bf16.msra.mxu0 %v2166
        %2409 = vmatpush.bf16.msra.mxu0 %v2160
        %2410 = vmatpush.bf16.msra.mxu0 %v2154
        %2411 = vmatpush.bf16.msra.mxu0 %v2148
        %2412 = vmatmul.bf16.gmra.mxu0 %v1981
        %v2413 = vpop.f32.mrf.mxu0
        %v2414 = vadd.f32 0.0, %v2413
        %v2415 = vpop.f32.mrf.mxu0
        %v2416 = vadd.f32 0.0, %v2415
        %2417 = vmatmul.bf16.gmra.mxu0 %v1985
        %v2418 = vpop.f32.mrf.mxu0
        %v2419 = vadd.f32 0.0, %v2418
        %v2420 = vpop.f32.mrf.mxu0
        %v2421 = vadd.f32 0.0, %v2420
        %2422 = vmatmul.bf16.gmra.mxu0 %v1989
        %v2423 = vpop.f32.mrf.mxu0
        %v2424 = vadd.f32 0.0, %v2423
        %v2425 = vpop.f32.mrf.mxu0
        %v2426 = vadd.f32 0.0, %v2425
        %2427 = vmatmul.bf16.gmra.mxu0 %v1993
        %v2428 = vpop.f32.mrf.mxu0
        %v2429 = vadd.f32 0.0, %v2428
        %v2430 = vpop.f32.mrf.mxu0
        %v2431 = vadd.f32 0.0, %v2430
        %2432 = vmatmul.bf16.gmra.mxu0 %v1992
        %v2433 = vpop.f32.mrf.mxu0
        %v2434 = vadd.f32 0.0, %v2433
        %v2435 = vpop.f32.mrf.mxu0
        %2436 = vdwg.mxu0
        %v2437 = vadd.f32 %v1872, %v2249
        %v2438 = vadd.f32 %v1873, %v2282
        %v2439 = vadd.f32 %v1874, %v2315
        %v2440 = vadd.f32 %v1875, %v2348
        %v2441 = vadd.f32 %v1876, %v2381
        %v2442 = vadd.f32 %v1877, %v2414
        %v2443 = vadd.f32 %v1878, %v2251
        %v2444 = vadd.f32 %v1879, %v2284
        %v2445 = vadd.f32 %v1880, %v2317
        %v2446 = vadd.f32 %v1881, %v2350
        %v2447 = vadd.f32 %v1882, %v2383
        %v2448 = vadd.f32 %v1883, %v2416
        %v2449 = vadd.f32 %v1884, %v2254
        %v2450 = vadd.f32 %v1885, %v2287
        %v2451 = vadd.f32 %v1886, %v2320
        %v2452 = vadd.f32 %v1887, %v2353
        %v2453 = vadd.f32 %v1888, %v2386
        %v2454 = vadd.f32 %v1889, %v2419
        %v2455 = vadd.f32 %v1890, %v2256
        %v2456 = vadd.f32 %v1891, %v2289
        %v2457 = vadd.f32 %v1892, %v2322
        %v2458 = vadd.f32 %v1893, %v2355
        %v2459 = vadd.f32 %v1894, %v2388
        %v2460 = vadd.f32 %v1895, %v2421
        %v2461 = vadd.f32 %v1896, %v2259
        %v2462 = vadd.f32 %v1897, %v2292
        %v2463 = vadd.f32 %v1898, %v2325
        %v2464 = vadd.f32 %v1899, %v2358
        %v2465 = vadd.f32 %v1900, %v2391
        %v2466 = vadd.f32 %v1901, %v2424
        %v2467 = vadd.f32 %v1902, %v2261
        %v2468 = vadd.f32 %v1903, %v2294
        %v2469 = vadd.f32 %v1904, %v2327
        %v2470 = vadd.f32 %v1905, %v2360
        %v2471 = vadd.f32 %v1906, %v2393
        %v2472 = vadd.f32 %v1907, %v2426
        %v2473 = vadd.f32 %v1908, %v2264
        %v2474 = vadd.f32 %v1909, %v2297
        %v2475 = vadd.f32 %v1910, %v2330
        %v2476 = vadd.f32 %v1911, %v2363
        %v2477 = vadd.f32 %v1912, %v2396
        %v2478 = vadd.f32 %v1913, %v2429
        %v2479 = vadd.f32 %v1914, %v2266
        %v2480 = vadd.f32 %v1915, %v2299
        %v2481 = vadd.f32 %v1916, %v2332
        %v2482 = vadd.f32 %v1917, %v2365
        %v2483 = vadd.f32 %v1918, %v2398
        %v2484 = vadd.f32 %v1919, %v2431
        %v2485 = vadd.f32 %v1920, %v2269
        %v2486 = vadd.f32 %v1921, %v2302
        %v2487 = vadd.f32 %v1922, %v2335
        %v2488 = vadd.f32 %v1923, %v2368
        %v2489 = vadd.f32 %v1924, %v2401
        %v2490 = vadd.f32 %v1925, %v2434
        %v2491 = vmul.f32 %v2437, %v2437
        %v2492 = vmul.f32 %v2438, %v2438
        %v2493 = vmul.f32 %v2439, %v2439
        %v2494 = vmul.f32 %v2443, %v2443
        %v2495 = vmul.f32 %v2444, %v2444
        %v2496 = vmul.f32 %v2445, %v2445
        %v2497 = vmul.f32 %v2449, %v2449
        %v2498 = vmul.f32 %v2450, %v2450
        %v2499 = vmul.f32 %v2451, %v2451
        %v2500 = vmul.f32 %v2455, %v2455
        %v2501 = vmul.f32 %v2456, %v2456
        %v2502 = vmul.f32 %v2457, %v2457
        %v2503 = vmul.f32 %v2461, %v2461
        %v2504 = vmul.f32 %v2462, %v2462
        %v2505 = vmul.f32 %v2463, %v2463
        %v2506 = vmul.f32 %v2467, %v2467
        %v2507 = vmul.f32 %v2468, %v2468
        %v2508 = vmul.f32 %v2469, %v2469
        %v2509 = vmul.f32 %v2473, %v2473
        %v2510 = vmul.f32 %v2474, %v2474
        %v2511 = vmul.f32 %v2475, %v2475
        %v2512 = vmul.f32 %v2479, %v2479
        %v2513 = vmul.f32 %v2480, %v2480
        %v2514 = vmul.f32 %v2481, %v2481
        %v2515 = vmul.f32 %v2485, %v2485
        %v2516 = vmul.f32 %v2486, %v2486
        %v2517 = vmul.f32 %v2487, %v2487
        %v2518 = vmul.f32 %v2440, %v2440
        %v2519 = vmul.f32 %v2441, %v2441
        %v2520 = vmul.f32 %v2442, %v2442
        %v2521 = vmul.f32 %v2446, %v2446
        %v2522 = vmul.f32 %v2447, %v2447
        %v2523 = vmul.f32 %v2448, %v2448
        %v2524 = vmul.f32 %v2452, %v2452
        %v2525 = vmul.f32 %v2453, %v2453
        %v2526 = vmul.f32 %v2454, %v2454
        %v2527 = vmul.f32 %v2458, %v2458
        %v2528 = vmul.f32 %v2459, %v2459
        %v2529 = vmul.f32 %v2460, %v2460
        %v2530 = vmul.f32 %v2464, %v2464
        %v2531 = vmul.f32 %v2465, %v2465
        %v2532 = vmul.f32 %v2466, %v2466
        %v2533 = vmul.f32 %v2470, %v2470
        %v2534 = vmul.f32 %v2471, %v2471
        %v2535 = vmul.f32 %v2472, %v2472
        %v2536 = vmul.f32 %v2476, %v2476
        %v2537 = vmul.f32 %v2477, %v2477
        %v2538 = vmul.f32 %v2478, %v2478
        %v2539 = vmul.f32 %v2482, %v2482
        %v2540 = vmul.f32 %v2483, %v2483
        %v2541 = vmul.f32 %v2484, %v2484
        %v2542 = vmul.f32 %v2488, %v2488
        %v2543 = vmul.f32 %v2489, %v2489
        %v2544 = vmul.f32 %v2490, %v2490
        %v2545 = vadd.f32 %v2491, %v2518
        %v2546 = vadd.f32 %v2492, %v2519
        %v2547 = vadd.f32 %v2493, %v2520
        %v2548 = vadd.f32 %v2494, %v2521
        %v2549 = vadd.f32 %v2495, %v2522
        %v2550 = vadd.f32 %v2496, %v2523
        %v2551 = vadd.f32 %v2497, %v2524
        %v2552 = vadd.f32 %v2498, %v2525
        %v2553 = vadd.f32 %v2499, %v2526
        %v2554 = vadd.f32 %v2500, %v2527
        %v2555 = vadd.f32 %v2501, %v2528
        %v2556 = vadd.f32 %v2502, %v2529
        %v2557 = vadd.f32 %v2503, %v2530
        %v2558 = vadd.f32 %v2504, %v2531
        %v2559 = vadd.f32 %v2505, %v2532
        %v2560 = vadd.f32 %v2506, %v2533
        %v2561 = vadd.f32 %v2507, %v2534
        %v2562 = vadd.f32 %v2508, %v2535
        %v2563 = vadd.f32 %v2509, %v2536
        %v2564 = vadd.f32 %v2510, %v2537
        %v2565 = vadd.f32 %v2511, %v2538
        %v2566 = vadd.f32 %v2512, %v2539
        %v2567 = vadd.f32 %v2513, %v2540
        %v2568 = vadd.f32 %v2514, %v2541
        %v2569 = vadd.f32 %v2515, %v2542
        %v2570 = vadd.f32 %v2516, %v2543
        %v2571 = vadd.f32 %v2517, %v2544
        %v2572 = vpack.c.bf16 %v2548, %v2545
        %v2573 = vpack.c.bf16 %v2549, %v2546
        %v2574 = vpack.c.bf16 %v2550, %v2547
        %v2575 = vpack.c.bf16 %v2554, %v2551
        %v2576 = vpack.c.bf16 %v2555, %v2552
        %v2577 = vpack.c.bf16 %v2556, %v2553
        %v2578 = vpack.c.bf16 %v2560, %v2557
        %v2579 = vpack.c.bf16 %v2561, %v2558
        %v2580 = vpack.c.bf16 %v2562, %v2559
        %v2581 = vpack.c.bf16 %v2566, %v2563
        %v2582 = vpack.c.bf16 %v2567, %v2564
        %v2583 = vpack.c.bf16 %v2568, %v2565
        %v2584 = vpack.c.bf16 %v2569, %v2569
        %v2585 = vpack.c.bf16 %v2570, %v2570
        %v2586 = vpack.c.bf16 %v2571, %v2571
        %v2587 = vld [vmem:[#allocation8] sm:$0xf]
        %v2588 = vld [vmem:[#allocation8 + $0x4] sm:$0xf]
        %v2589 = vld [vmem:[#allocation8 + $0x8] sm:$0xf]
        %v2590 = vld [vmem:[#allocation8 + $0xc] sm:$0xf]
        %v2591 = vld [vmem:[#allocation8 + $0x10] sm:$0xf]
        %v2592 = vld [vmem:[#allocation8 + $0x14] sm:$0xf]
        %v2593 = vld [vmem:[#allocation8 + $0x18] sm:$0xf]
        %v2594 = vld [vmem:[#allocation8 + $0x1c] sm:$0xf]
        %v2595 = vld [vmem:[#allocation8 + $0x20] sm:$0xf]
        %v2596 = vld [vmem:[#allocation8 + $0x24] sm:$0xf]
        %v2597 = vld [vmem:[#allocation8 + $0x28] sm:$0xf]
        %v2598 = vld [vmem:[#allocation8 + $0x2c] sm:$0xf]
        %v2599 = vld [vmem:[#allocation8 + $0x30] sm:$0xf]
        %v2600 = vld [vmem:[#allocation8 + $0x34] sm:$0xf]
        %v2601 = vld [vmem:[#allocation8 + $0x38] sm:$0xf]
        %v2602 = vld [vmem:[#allocation8 + $0x3c] sm:$0xf]
        %v2603 = vld [vmem:[#allocation8 + $0x40] sm:$0xf]
        %v2604 = vld [vmem:[#allocation8 + $0x44] sm:$0xf]
        %v2605 = vld [vmem:[#allocation8 + $0x48] sm:$0xf]
        %v2606 = vld [vmem:[#allocation8 + $0x4c] sm:$0xf]
        %v2607 = vld [vmem:[#allocation8 + $0x50] sm:$0xf]
        %v2608 = vld [vmem:[#allocation8 + $0x54] sm:$0xf]
        %v2609 = vld [vmem:[#allocation8 + $0x58] sm:$0xf]
        %v2610 = vld [vmem:[#allocation8 + $0x5c] sm:$0xf]
        %v2611 = vld [vmem:[#allocation8 + $0x60] sm:$0xf]
        %v2612 = vld [vmem:[#allocation8 + $0x64] sm:$0xf]
        %v2613 = vld [vmem:[#allocation8 + $0x68] sm:$0xf]
        %v2614 = vld [vmem:[#allocation8 + $0x6c] sm:$0xf]
        %v2615 = vld [vmem:[#allocation8 + $0x70] sm:$0xf]
        %v2616 = vld [vmem:[#allocation8 + $0x74] sm:$0xf]
        %v2617 = vld [vmem:[#allocation8 + $0x78] sm:$0xf]
        %v2618 = vld [vmem:[#allocation8 + $0x7c] sm:$0xf]
        %v2619 = vld [vmem:[#allocation8 + $0x80] sm:$0xf]
        %v2620 = vld [vmem:[#allocation8 + $0x84] sm:$0xf]
        %v2621 = vld [vmem:[#allocation8 + $0x88] sm:$0xf]
        %v2622 = vld [vmem:[#allocation8 + $0x8c] sm:$0xf]
        %v2623 = vld [vmem:[#allocation8 + $0x90] sm:$0xf]
        %v2624 = vld [vmem:[#allocation8 + $0x94] sm:$0xf]
        %v2625 = vld [vmem:[#allocation8 + $0x98] sm:$0xf]
        %v2626 = vld [vmem:[#allocation8 + $0x9c] sm:$0xf]
        %v2627 = vld [vmem:[#allocation8 + $0xa0] sm:$0xf]
        %v2628 = vld [vmem:[#allocation8 + $0xa4] sm:$0xf]
        %v2629 = vld [vmem:[#allocation8 + $0xa8] sm:$0xf]
        %v2630 = vld [vmem:[#allocation8 + $0xac] sm:$0xf]
        %v2631 = vld [vmem:[#allocation8 + $0xb0] sm:$0xf]
        %v2632 = vld [vmem:[#allocation8 + $0xb4] sm:$0xf]
        %v2633 = vld [vmem:[#allocation8 + $0xb8] sm:$0xf]
        %v2634 = vld [vmem:[#allocation8 + $0xbc] sm:$0xf]
        %v2683 = vunpack.c.l.b16 %v2587
        %v2684 = vunpack.c.l.b16 %v2588
        %v2685 = vunpack.c.l.b16 %v2589
        %v2686 = vunpack.c.l.b16 %v2590
        %v2687 = vunpack.c.l.b16 %v2591
        %v2688 = vunpack.c.l.b16 %v2592
        %v2689 = vunpack.c.l.b16 %v2593
        %v2690 = vunpack.c.l.b16 %v2594
        %v2691 = vunpack.c.l.b16 %v2595
        %v2692 = vunpack.c.l.b16 %v2596
        %v2693 = vunpack.c.l.b16 %v2597
        %v2694 = vunpack.c.l.b16 %v2598
        %v2695 = vunpack.c.l.b16 %v2599
        %v2696 = vunpack.c.l.b16 %v2600
        %v2697 = vunpack.c.l.b16 %v2601
        %v2698 = vunpack.c.l.b16 %v2602
        %v2699 = vunpack.c.l.b16 %v2603
        %v2700 = vunpack.c.l.b16 %v2604
        %v2701 = vunpack.c.l.b16 %v2605
        %v2702 = vunpack.c.l.b16 %v2606
        %v2703 = vunpack.c.l.b16 %v2607
        %v2704 = vunpack.c.l.b16 %v2608
        %v2705 = vunpack.c.l.b16 %v2609
        %v2706 = vunpack.c.l.b16 %v2610
        %v2707 = vunpack.c.l.b16 %v2611
        %v2708 = vunpack.c.l.b16 %v2612
        %v2709 = vunpack.c.l.b16 %v2613
        %v2710 = vunpack.c.l.b16 %v2614
        %v2711 = vunpack.c.l.b16 %v2615
        %v2712 = vunpack.c.l.b16 %v2616
        %v2713 = vunpack.c.l.b16 %v2617
        %v2714 = vunpack.c.l.b16 %v2618
        %v2715 = vunpack.c.l.b16 %v2619
        %v2716 = vunpack.c.l.b16 %v2620
        %v2717 = vunpack.c.l.b16 %v2621
        %v2718 = vunpack.c.l.b16 %v2622
        %v2719 = vunpack.c.l.b16 %v2623
        %v2720 = vunpack.c.l.b16 %v2624
        %v2721 = vunpack.c.l.b16 %v2625
        %v2722 = vunpack.c.l.b16 %v2626
        %v2723 = vunpack.c.l.b16 %v2627
        %v2724 = vunpack.c.l.b16 %v2628
        %v2725 = vunpack.c.l.b16 %v2629
        %v2726 = vunpack.c.l.b16 %v2630
        %v2727 = vunpack.c.l.b16 %v2631
        %v2728 = vunpack.c.l.b16 %v2632
        %v2729 = vunpack.c.l.b16 %v2633
        %v2730 = vunpack.c.l.b16 %v2634
        %v2731 = vpack.c.b16 %v2684, %v2683
        %v2732 = vpack.c.b16 %v2686, %v2685
        %v2733 = vpack.c.b16 %v2688, %v2687
        %v2734 = vpack.c.b16 %v2690, %v2689
        %v2735 = vpack.c.b16 %v2692, %v2691
        %v2736 = vpack.c.b16 %v2694, %v2693
        %v2737 = vpack.c.b16 %v2696, %v2695
        %v2738 = vpack.c.b16 %v2698, %v2697
        %v2739 = vpack.c.b16 %v2700, %v2699
        %v2740 = vpack.c.b16 %v2702, %v2701
        %v2741 = vpack.c.b16 %v2704, %v2703
        %v2742 = vpack.c.b16 %v2706, %v2705
        %v2743 = vpack.c.b16 %v2708, %v2707
        %v2744 = vpack.c.b16 %v2710, %v2709
        %v2745 = vpack.c.b16 %v2712, %v2711
        %v2746 = vpack.c.b16 %v2714, %v2713
        %v2747 = vpack.c.b16 %v2716, %v2715
        %v2748 = vpack.c.b16 %v2718, %v2717
        %v2749 = vpack.c.b16 %v2720, %v2719
        %v2750 = vpack.c.b16 %v2722, %v2721
        %v2751 = vpack.c.b16 %v2724, %v2723
        %v2752 = vpack.c.b16 %v2726, %v2725
        %v2753 = vpack.c.b16 %v2728, %v2727
        %v2754 = vpack.c.b16 %v2730, %v2729
        %2779 = vmatpush.bf16.msra.mxu0 %v2738
        %2780 = vmatpush.bf16.msra.mxu0 %v2737
        %2781 = vmatpush.bf16.msra.mxu0 %v2736
        %2782 = vmatpush.bf16.msra.mxu0 %v2735
        %2783 = vmatpush.bf16.msra.mxu0 %v2734
        %2784 = vmatpush.bf16.msra.mxu0 %v2733
        %2785 = vmatpush.bf16.msra.mxu0 %v2732
        %2786 = vmatpush.bf16.msra.mxu0 %v2731
        %2787 = vmatmul.bf16.gmra.mxu0 %v2572
        %v2788 = vpop.f32.mrf.mxu0
        %v2789 = vadd.f32 0.0, %v2788
        %v2790 = vpop.f32.mrf.mxu0
        %v2791 = vadd.f32 0.0, %v2790
        %2792 = vmatmul.bf16.gmra.mxu0 %v2575
        %v2793 = vpop.f32.mrf.mxu0
        %v2794 = vadd.f32 0.0, %v2793
        %v2795 = vpop.f32.mrf.mxu0
        %v2796 = vadd.f32 0.0, %v2795
        %2797 = vmatmul.bf16.gmra.mxu0 %v2578
        %v2798 = vpop.f32.mrf.mxu0
        %v2799 = vadd.f32 0.0, %v2798
        %v2800 = vpop.f32.mrf.mxu0
        %v2801 = vadd.f32 0.0, %v2800
        %2802 = vmatmul.bf16.gmra.mxu0 %v2581
        %v2803 = vpop.f32.mrf.mxu0
        %v2804 = vadd.f32 0.0, %v2803
        %v2805 = vpop.f32.mrf.mxu0
        %v2806 = vadd.f32 0.0, %v2805
        %2807 = vmatmul.bf16.gmra.mxu0 %v2584
        %v2808 = vpop.f32.mrf.mxu0
        %v2809 = vadd.f32 0.0, %v2808
        %v2810 = vpop.f32.mrf.mxu0
        %2811 = vdwg.mxu0
        %2812 = vmatpush.bf16.msra.mxu0 %v2746
        %2813 = vmatpush.bf16.msra.mxu0 %v2745
        %2814 = vmatpush.bf16.msra.mxu0 %v2744
        %2815 = vmatpush.bf16.msra.mxu0 %v2743
        %2816 = vmatpush.bf16.msra.mxu0 %v2742
        %2817 = vmatpush.bf16.msra.mxu0 %v2741
        %2818 = vmatpush.bf16.msra.mxu0 %v2740
        %2819 = vmatpush.bf16.msra.mxu0 %v2739
        %2820 = vmatmul.bf16.gmra.mxu0 %v2573
        %v2821 = vpop.f32.mrf.mxu0
        %v2822 = vadd.f32 %v2789, %v2821
        %v2823 = vpop.f32.mrf.mxu0
        %v2824 = vadd.f32 %v2791, %v2823
        %2825 = vmatmul.bf16.gmra.mxu0 %v2576
        %v2826 = vpop.f32.mrf.mxu0
        %v2827 = vadd.f32 %v2794, %v2826
        %v2828 = vpop.f32.mrf.mxu0
        %v2829 = vadd.f32 %v2796, %v2828
        %2830 = vmatmul.bf16.gmra.mxu0 %v2579
        %v2831 = vpop.f32.mrf.mxu0
        %v2832 = vadd.f32 %v2799, %v2831
        %v2833 = vpop.f32.mrf.mxu0
        %v2834 = vadd.f32 %v2801, %v2833
        %2835 = vmatmul.bf16.gmra.mxu0 %v2582
        %v2836 = vpop.f32.mrf.mxu0
        %v2837 = vadd.f32 %v2804, %v2836
        %v2838 = vpop.f32.mrf.mxu0
        %v2839 = vadd.f32 %v2806, %v2838
        %2840 = vmatmul.bf16.gmra.mxu0 %v2585
        %v2841 = vpop.f32.mrf.mxu0
        %v2842 = vadd.f32 %v2809, %v2841
        %v2843 = vpop.f32.mrf.mxu0
        %2844 = vdwg.mxu0
        %2845 = vmatpush.bf16.msra.mxu0 %v2754
        %2846 = vmatpush.bf16.msra.mxu0 %v2753
        %2847 = vmatpush.bf16.msra.mxu0 %v2752
        %2848 = vmatpush.bf16.msra.mxu0 %v2751
        %2849 = vmatpush.bf16.msra.mxu0 %v2750
        %2850 = vmatpush.bf16.msra.mxu0 %v2749
        %2851 = vmatpush.bf16.msra.mxu0 %v2748
        %2852 = vmatpush.bf16.msra.mxu0 %v2747
        %2853 = vmatmul.bf16.gmra.mxu0 %v2574
        %v2854 = vpop.f32.mrf.mxu0
        %v2855 = vadd.f32 %v2822, %v2854
        %v2856 = vpop.f32.mrf.mxu0
        %v2857 = vadd.f32 %v2824, %v2856
        %2858 = vmatmul.bf16.gmra.mxu0 %v2577
        %v2859 = vpop.f32.mrf.mxu0
        %v2860 = vadd.f32 %v2827, %v2859
        %v2861 = vpop.f32.mrf.mxu0
        %v2862 = vadd.f32 %v2829, %v2861
        %2863 = vmatmul.bf16.gmra.mxu0 %v2580
        %v2864 = vpop.f32.mrf.mxu0
        %v2865 = vadd.f32 %v2832, %v2864
        %v2866 = vpop.f32.mrf.mxu0
        %v2867 = vadd.f32 %v2834, %v2866
        %2868 = vmatmul.bf16.gmra.mxu0 %v2583
        %v2869 = vpop.f32.mrf.mxu0
        %v2870 = vadd.f32 %v2837, %v2869
        %v2871 = vpop.f32.mrf.mxu0
        %v2872 = vadd.f32 %v2839, %v2871
        %2873 = vmatmul.bf16.gmra.mxu0 %v2586
        %v2874 = vpop.f32.mrf.mxu0
        %v2875 = vadd.f32 %v2842, %v2874
        %v2876 = vpop.f32.mrf.mxu0
        %2877 = vdwg.mxu0
        %v2878 = vmax.f32 %v2855, 1e-10
        %v2879 = vmax.f32 %v2857, 1e-10
        %v2880 = vmax.f32 %v2860, 1e-10
        %v2881 = vmax.f32 %v2862, 1e-10
        %v2882 = vmax.f32 %v2865, 1e-10
        %v2883 = vmax.f32 %v2867, 1e-10
        %v2884 = vmax.f32 %v2870, 1e-10
        %v2885 = vmax.f32 %v2872, 1e-10
        %v2886 = vmax.f32 %v2875, 1e-10
        %v2887 = vlog2.pop %v2878
        %v2888 = vmul.f32 %v2887, 0.6931472
        %v2889 = vlog2.pop %v2879
        %v2890 = vmul.f32 %v2889, 0.6931472
        %v2891 = vlog2.pop %v2880
        %v2892 = vmul.f32 %v2891, 0.6931472
        %v2893 = vlog2.pop %v2881
        %v2894 = vmul.f32 %v2893, 0.6931472
        %v2895 = vlog2.pop %v2882
        %v2896 = vmul.f32 %v2895, 0.6931472
        %v2897 = vlog2.pop %v2883
        %v2898 = vmul.f32 %v2897, 0.6931472
        %v2899 = vlog2.pop %v2884
        %v2900 = vmul.f32 %v2899, 0.6931472
        %v2901 = vlog2.pop %v2885
        %v2902 = vmul.f32 %v2901, 0.6931472
        %v2903 = vlog2.pop %v2886
        %v2904 = vmul.f32 %v2903, 0.6931472
        %v2905 = vmul.f32 %v2888, 0.4342945
        %v2906 = vmul.f32 %v2890, 0.4342945
        %v2907 = vmul.f32 %v2892, 0.4342945
        %v2908 = vmul.f32 %v2894, 0.4342945
        %v2909 = vmul.f32 %v2896, 0.4342945
        %v2910 = vmul.f32 %v2898, 0.4342945
        %v2911 = vmul.f32 %v2900, 0.4342945
        %v2912 = vmul.f32 %v2902, 0.4342945
        %v2913 = vmul.f32 %v2904, 0.4342945
        %v2914 = vmul.f32 %v2905, 10.0
        %v2915 = vmul.f32 %v2906, 10.0
        %v2916 = vmul.f32 %v2907, 10.0
        %v2917 = vmul.f32 %v2908, 10.0
        %v2918 = vmul.f32 %v2909, 10.0
        %v2919 = vmul.f32 %v2910, 10.0
        %v2920 = vmul.f32 %v2911, 10.0
        %v2921 = vmul.f32 %v2912, 10.0
        %v2922 = vmul.f32 %v2913, 10.0
        %2923 = vst [vmem:[%s324] sm:$0xff] %v2914
        %2924 = vst [vmem:[%s324 + $0x8] sm:$0xff] %v2915
        %2925 = vst [vmem:[%s324 + $0x10] sm:$0xff] %v2916
        %2926 = vst [vmem:[%s324 + $0x18] sm:$0xff] %v2917
        %2927 = vst [vmem:[%s324 + $0x20] sm:$0xff] %v2918
        %2928 = vst [vmem:[%s324 + $0x28] sm:$0xff] %v2919
        %2929 = vst [vmem:[%s324 + $0x30] sm:$0xff] %v2920
        %2930 = vst [vmem:[%s324 + $0x38] sm:$0xff] %v2921
        %2931 = vst [vmem:[%s324 + $0x40] sm:$0xff] %v2922
        %s2932 = sand.u32 %s149, 1
        %s2933 = scalar_lea.sflag [#allocation4], %s2932
        %s2934 = sand.u32 %s149, 1
        %s2935 = smul.addr %s2934, 72
        %s2936 = scalar_lea.vmem [#allocation10], %s2935
        // Predicated region
        $region53: #{tpu_custom_call.1} parent=35 // pred_check
          %p2937 = pneg %p159
        $region54: #{tpu_custom_call.1} parent=35 // pred_check_branch
          %2939 = sbr.rel (%p2937) target = $region56
        $region55: #{tpu_custom_call.1} parent=35 // pred_region
          %s2940 = smul.u32 9, %s30
          %2942 = vsyncadd %s2933, 0
          %s2943 = smul.addr %s29, 9
          %s2944 = sadd.s32 %s2940, %s2943
          %s2945 = smul.addr %s2944, 8
          %s2946 = scalar_lea.hbm %s4, %s2945
          %s2947 = sshll.u32 %s2936, 4
          %s2948 = int_to_ptr.vmem [resolvable:$true] %s2947
          %s2949 = sshll.u32 %s2946, 4
          %s2950 = int_to_ptr.hbm [resolvable:$true] %s2949
          %2955 = dma.vmem_to_hbm [thread:$0]  %s2948, 1152, %s2950, %s2933, 128, 128, 8
        $region56: #{tpu_custom_call.1} parent=35 // pred_fallthru
          _
      $region36: #{tpu_custom_call.1} parent=5 // pred_fallthru
        _
      %p2956 = scmp.le.s32.totalorder 2, %s20
      // Predicated region
      $region57: #{tpu_custom_call.1} parent=5 // pred_check
        %p2957 = pneg %p2956
      $region58: #{tpu_custom_call.1} parent=5 // pred_check_branch
        %2959 = sbr.rel (%p2957) target = $region60
      $region59: #{tpu_custom_call.1} parent=5 // pred_region
        %s2960 = ssub.s32 %s20, 2
        // Predicated region
        $region61: #{tpu_custom_call.1} parent=59 // pred_check
          %p2961 = pneg %p165
        $region62: #{tpu_custom_call.1} parent=59 // pred_check_branch
          %2963 = sbr.rel (%p2961) target = $region64
        $region63: #{tpu_custom_call.1} parent=59 // pred_region
          %s2964 = sand.u32 %s150, 1
          %s2965 = scalar_lea.sflag [#allocation4], %s2964
          %s2966 = sand.u32 %s150, 1
          %s2967 = smul.addr %s2966, 72
          %s2968 = scalar_lea.vmem [#allocation10], %s2967
          %2970 = dma.done %s2965, 1152
        $region64: #{tpu_custom_call.1} parent=59 // pred_fallthru
          _
      $region60: #{tpu_custom_call.1} parent=5 // pred_fallthru
        _
    $region6: #{tpu_custom_call.1} parent=1 // loop_footer
      %s24 = sadd.s32 1, %s20
    $region7: #{tpu_custom_call.1} parent=1 // loop_footer_branch
      %19 = sbr.rel target = $region3
    $region8: #{tpu_custom_call.1} parent=1 // loop_exit
      _
    %2971 = vsyncpa [#allocation3], 1
    %s2972 = scalar_lea.sflag [#allocation3], 1
    %2973 = vsyncpa %s2972, 1
    %2974 = vsyncpa [#allocation6], 1
    %s2975 = scalar_lea.sflag [#allocation6], 1
    %2976 = vsyncpa %s2975, 1
    %2977 = vsyncpa [#allocation9], 1
    %2978 = vsyncpa [#allocation4], 1
    %s2979 = scalar_lea.sflag [#allocation4], 1
    %2980 = vsyncpa %s2979, 1

</llo_original>
